<compile_context>
chip_gen: v5e
topology: v5e:2x2
jax: 0.10.0
libtpu: 0.0.40
codegen_flags: <defaults>
</compile_context>

<pallas_src>
import functools

import jax
import jax.numpy as jnp
from jax.experimental import pallas as pl
from jax.experimental.pallas import tpu as pltpu

# ---- static config implied by the module -----------------------------------
C_IN = 5
C_OUT = 1200
K_SIZE = 11
POOL = 290
L_IN = 300                       # minimal valid length: conv out = 290 -> pool out = 1
L_CONV = L_IN - K_SIZE + 1       # 290
K_FLAT = C_IN * K_SIZE           # 55
BN_EPS = 1e-5

# TPU-friendly padded tile sizes
M_PAD = 320                      # conv positions per sample, padded (multiple of 8)
K_PAD = 64                       # im2col contraction dim, padded 55 -> 64
N_PAD = 1280                     # output channels, padded to a lane multiple


# ---- Pallas kernel ----------------------------------------------------------
def pattern_branch_kernel(patches_ref, w_ref, scale_ref, shift_ref, lin_ref,
                          o_ref, *, b_tile):
    # patches_ref: (b_tile * M_PAD, K_PAD)   im2col patches for b_tile samples
    # w_ref      : (K_PAD, N_PAD)            conv weights reshaped for matmul
    # scale_ref  : (1, N_PAD)                folded BN scale (gamma / sqrt(var+eps))
    # shift_ref  : (1, N_PAD)                folded conv-bias + BN shift
    # lin_ref    : (2,) in SMEM              [linear weight, linear bias]
    # o_ref      : (1, b_tile, N_PAD)
    acc = jnp.dot(patches_ref[...], w_ref[...],
                  preferred_element_type=jnp.float32)      # conv as one MXU matmul
    acc = acc * scale_ref[...] + shift_ref[...]            # conv bias + eval-mode BN

    # MaxPool1d(290): rows 290..319 are edge-replicated copies of a real row, so a
    # plain max over all M_PAD rows of each sample is exact -- no mask needed.
    acc = acc.reshape(b_tile, M_PAD, N_PAD)
    m = jnp.max(acc, axis=1)                               # (b_tile, N_PAD)
    m = jnp.maximum(m, 0.0)                                # ReLU
    # TODO(synk): Dropout1d layers are identity here (inference); training-mode
    # stochastic channel dropout is not implemented.
    o_ref[0] = m * lin_ref[0] + lin_ref[1]                 # Linear(1, 1)


# ---- wrapper: im2col, padding, param folding in plain JAX --------------------
def pattern_branch(x, params, *, b_tile=None):
    """x: (B, 5, 300) float32  ->  (B, 1200, 1) float32 (eval-mode forward)."""
    B = x.shape[0]
    w, cb, gamma, beta, rmean, rvar, lin_w, lin_b = params

    if b_tile is None:
        # keep >= 2 parallel grid steps whenever B >= 2 (v7x has 2 TensorCores);
        # cap the tile so the f32 matmul result (b_tile*320*1280*4B) stays small.
        b_tile = max(1, min(4, B // 2))
    grid_b = pl.cdiv(B, b_tile)
    b_padded = grid_b * b_tile

    # im2col: patches[b, t, ci*11 + k] = x[b, ci, t + k]
    idx = jnp.arange(L_CONV)[:, None] + jnp.arange(K_SIZE)[None, :]   # (290, 11)
    patches = x[:, :, idx]                                            # (B, 5, 290, 11)
    patches = patches.transpose(0, 2, 1, 3).reshape(B, L_CONV, K_FLAT)
    # pad conv positions 290 -> 320 by replicating the last real row (max-safe)
    patches = jnp.pad(patches, ((0, 0), (0, M_PAD - L_CONV), (0, 0)), mode="edge")
    # zero-pad batch to a tile multiple and the contraction dim 55 -> 64
    patches = jnp.pad(patches, ((0, b_padded - B), (0, 0), (0, K_PAD - K_FLAT)))
    patches = patches.reshape(b_padded * M_PAD, K_PAD)

    # conv weight (1200, 5, 11) -> (55, 1200), padded to (64, 1280)
    w2 = w.transpose(1, 2, 0).reshape(K_FLAT, C_OUT)
    w2 = jnp.pad(w2, ((0, K_PAD - K_FLAT), (0, N_PAD - C_OUT)))

    # fold conv bias + eval-mode BatchNorm into a single per-channel affine
    s = gamma * jax.lax.rsqrt(rvar + BN_EPS)
    scale = jnp.pad(s, (0, N_PAD - C_OUT)).reshape(1, N_PAD)
    shift = jnp.pad(cb * s + beta - rmean * s, (0, N_PAD - C_OUT)).reshape(1, N_PAD)

    lin = jnp.array([lin_w, lin_b], dtype=jnp.float32)

    kernel = functools.partial(pattern_branch_kernel, b_tile=b_tile)
    out = pl.pallas_call(
        kernel,
        out_shape=jax.ShapeDtypeStruct((grid_b, b_tile, N_PAD), jnp.float32),
        grid_spec=pltpu.PrefetchScalarGridSpec(
            num_scalar_prefetch=0,
            grid=(grid_b,),
            in_specs=[
                pl.BlockSpec((b_tile * M_PAD, K_PAD), lambda i: (i, 0)),
                # constant index_map -> weights / affine stay VMEM-resident
                pl.BlockSpec((K_PAD, N_PAD), lambda i: (0, 0)),
                pl.BlockSpec((1, N_PAD), lambda i: (0, 0)),
                pl.BlockSpec((1, N_PAD), lambda i: (0, 0)),
                pl.BlockSpec(memory_space=pltpu.SMEM),
            ],
            out_specs=pl.BlockSpec((1, b_tile, N_PAD), lambda i: (i, 0, 0)),
        ),
        compiler_params=pltpu.CompilerParams(
            dimension_semantics=("parallel",),
            vmem_limit_bytes=32 * 1024 * 1024,
        ),
    )(patches, w2, scale, shift, lin)

    # (grid_b, b_tile, N_PAD) -> (B, 1200, 1), matching the PyTorch output layout
    out = out.reshape(b_padded, N_PAD)[:B, :C_OUT]
    return out[:, :, None]


# ---- pure-JAX reference for validation --------------------------------------
def reference(x, params):
    w, cb, gamma, beta, rmean, rvar, lin_w, lin_b = params
    z = jax.lax.conv_general_dilated(
        x, w, window_strides=(1,), padding="VALID",
        dimension_numbers=("NCH", "OIH", "NCH"))
    z = z + cb[None, :, None]
    z = gamma[None, :, None] * (z - rmean[None, :, None]) * jax.lax.rsqrt(
        rvar[None, :, None] + BN_EPS) + beta[None, :, None]
    z = jnp.max(z, axis=-1, keepdims=True)       # MaxPool1d(290): 290 -> 1
    z = jnp.maximum(z, 0.0)                      # ReLU (dropouts identity in eval)
    return z * lin_w + lin_b                     # Linear(1, 1)  -> (B, 1200, 1)


if __name__ == "__main__":
    key = jax.random.PRNGKey(0)
    kx, kw, kb, kg, kbeta, klw, klb = jax.random.split(key, 7)

    B = 2
    x = jax.random.normal(kx, (B, C_IN, L_IN), dtype=jnp.float32)

    # deterministic synthetic parameters (shapes from the module's __init__)
    conv_w = jax.random.normal(kw, (C_OUT, C_IN, K_SIZE), dtype=jnp.float32) * 0.05
    conv_b = jax.random.normal(kb, (C_OUT,), dtype=jnp.float32) * 0.05
    bn_gamma = 1.0 + 0.1 * jax.random.normal(kg, (C_OUT,), dtype=jnp.float32)
    bn_beta = 0.1 * jax.random.normal(kbeta, (C_OUT,), dtype=jnp.float32)
    bn_rmean = jnp.zeros((C_OUT,), dtype=jnp.float32)   # PyTorch default running stats
    bn_rvar = jnp.ones((C_OUT,), dtype=jnp.float32)
    lin_w = jax.random.normal(klw, (), dtype=jnp.float32)   # Linear(1,1).weight[0,0]
    lin_b = jax.random.normal(klb, (), dtype=jnp.float32)   # Linear(1,1).bias[0]

    params = (conv_w, conv_b, bn_gamma, bn_beta, bn_rmean, bn_rvar, lin_w, lin_b)

    out = jax.block_until_ready(pattern_branch(x, params))
    assert out.shape == (B, C_OUT, 1), out.shape

    ref = jax.block_until_ready(reference(x, params))
    assert jnp.allclose(out, ref, atol=1e-3, rtol=1e-3), \
        float(jnp.max(jnp.abs(out - ref)))

    print("KERNEL_OK")
</pallas_src>

<mosaic_0001>
module attributes {stable_mosaic.version = 11 : i64} {
  func.func @pattern_branch_kernel(%arg0: i32, %arg1: memref<320x64xf32, #tpu.memory_space<vmem>>, %arg2: memref<64x1280xf32, #tpu.memory_space<vmem>>, %arg3: memref<1x1280xf32, #tpu.memory_space<vmem>>, %arg4: memref<1x1280xf32, #tpu.memory_space<vmem>>, %arg5: memref<2xf32, #tpu.memory_space<smem>>, %arg6: memref<1x1x1280xf32, #tpu.memory_space<vmem>>) attributes {dimension_semantics = [#tpu.dimension_semantics<parallel>], iteration_bounds = array<i64: 2>, scalar_prefetch = 0 : i64, scratch_operands = 0 : i64, tpu.core_type = #tpu.core_type<tc>, window_params = [{transform_indices = @transform_0, window_bounds = array<i64: 320, 64>}, {pipeline_mode = #tpu.pipeline_mode<synchronous>, transform_indices = @transform_1, window_bounds = array<i64: 64, 1280>}, {pipeline_mode = #tpu.pipeline_mode<synchronous>, transform_indices = @transform_2, window_bounds = array<i64: 1, 1280>}, {pipeline_mode = #tpu.pipeline_mode<synchronous>, transform_indices = @transform_3, window_bounds = array<i64: 1, 1280>}, {transform_indices = @transform_4, window_bounds = array<i64: 2>}, {transform_indices = @transform_5, window_bounds = array<i64: 1, 1, 1280>}]} {
    %c0 = arith.constant 0 : index
    %c0_0 = arith.constant 0 : index
    %0 = vector.load %arg1[%c0, %c0_0] : memref<320x64xf32, #tpu.memory_space<vmem>>, vector<320x64xf32>
    %c0_1 = arith.constant 0 : index
    %c0_2 = arith.constant 0 : index
    %1 = vector.load %arg2[%c0_1, %c0_2] : memref<64x1280xf32, #tpu.memory_space<vmem>>, vector<64x1280xf32>
    %cst = arith.constant dense<0.000000e+00> : vector<320x1280xf32>
    %2 = tpu.matmul %0, %1, %cst {dimension_numbers = #tpu.dot_dimension_numbers<[1], [0], [0], [1], [0, 0, 1, 1], [], []>} : vector<320x64xf32>, vector<64x1280xf32>, vector<320x1280xf32> -> vector<320x1280xf32>
    %c0_3 = arith.constant 0 : index
    %c0_4 = arith.constant 0 : index
    %3 = vector.load %arg3[%c0_3, %c0_4] : memref<1x1280xf32, #tpu.memory_space<vmem>>, vector<1x1280xf32>
    %4 = vector.broadcast %3 : vector<1x1280xf32> to vector<320x1280xf32>
    %5 = arith.mulf %2, %4 : vector<320x1280xf32>
    %c0_5 = arith.constant 0 : index
    %c0_6 = arith.constant 0 : index
    %6 = vector.load %arg4[%c0_5, %c0_6] : memref<1x1280xf32, #tpu.memory_space<vmem>>, vector<1x1280xf32>
    %7 = vector.broadcast %6 : vector<1x1280xf32> to vector<320x1280xf32>
    %8 = arith.addf %5, %7 : vector<320x1280xf32>
    %9 = vector.shape_cast %8 : vector<320x1280xf32> to vector<1x320x1280xf32>
    %cst_7 = arith.constant dense<0xFF800000> : vector<1x1280xf32>
    %10 = vector.multi_reduction <maximumf>, %9, %cst_7 [1] : vector<1x320x1280xf32> to vector<1x1280xf32>
    %cst_8 = arith.constant 0.000000e+00 : f32
    %11 = vector.broadcast %cst_8 : f32 to vector<1x1280xf32>
    %12 = arith.maximumf %10, %11 : vector<1x1280xf32>
    %c0_9 = arith.constant 0 : index
    %13 = memref.load %arg5[%c0_9] : memref<2xf32, #tpu.memory_space<smem>>
    %14 = vector.broadcast %13 : f32 to vector<1x1280xf32>
    %15 = arith.mulf %12, %14 : vector<1x1280xf32>
    %c1 = arith.constant 1 : index
    %16 = memref.load %arg5[%c1] : memref<2xf32, #tpu.memory_space<smem>>
    %17 = vector.broadcast %16 : f32 to vector<1x1280xf32>
    %18 = arith.addf %15, %17 : vector<1x1280xf32>
    %c0_10 = arith.constant 0 : index
    %c0_11 = arith.constant 0 : index
    %c0_12 = arith.constant 0 : index
    %19 = vector.load %arg6[%c0_10, %c0_11, %c0_12] : memref<1x1x1280xf32, #tpu.memory_space<vmem>>, vector<1x1x1280xf32>
    %20 = vector.shape_cast %19 : vector<1x1x1280xf32> to vector<1x1280xf32>
    %21 = vector.shape_cast %18 : vector<1x1280xf32> to vector<1x1x1280xf32>
    tpu.vector_store %arg6[%c0_10, %c0_11, %c0_12], %21 {strides = array<i32>} : memref<1x1x1280xf32, #tpu.memory_space<vmem>>, vector<1x1x1280xf32>,
    return
  }
  func.func @transform_0(%arg0: i32) -> (i32, i32) {
    %c0_i32 = arith.constant 0 : i32
    %c0_i32_0 = arith.constant 0 : i32
    return %arg0, %c0_i32 : i32, i32
  }
  func.func @transform_1(%arg0: i32) -> (i32, i32) {
    %c0_i32 = arith.constant 0 : i32
    %c0_i32_0 = arith.constant 0 : i32
    %c0_i32_1 = arith.constant 0 : i32
    return %c0_i32, %c0_i32_0 : i32, i32
  }
  func.func @transform_2(%arg0: i32) -> (i32, i32) {
    %c0_i32 = arith.constant 0 : i32
    %c0_i32_0 = arith.constant 0 : i32
    %c0_i32_1 = arith.constant 0 : i32
    return %c0_i32, %c0_i32_0 : i32, i32
  }
  func.func @transform_3(%arg0: i32) -> (i32, i32) {
    %c0_i32 = arith.constant 0 : i32
    %c0_i32_0 = arith.constant 0 : i32
    %c0_i32_1 = arith.constant 0 : i32
    return %c0_i32, %c0_i32_0 : i32, i32
  }
  func.func @transform_4(%arg0: i32) -> i32 {
    %c0_i32 = arith.constant 0 : i32
    %c0_i32_0 = arith.constant 0 : i32
    return %c0_i32 : i32
  }
  func.func @transform_5(%arg0: i32) -> (i32, i32, i32) {
    %c0_i32 = arith.constant 0 : i32
    %c0_i32_0 = arith.constant 0 : i32
    %c0_i32_1 = arith.constant 0 : i32
    return %arg0, %c0_i32, %c0_i32_0 : i32, i32, i32
  }
}

</mosaic_0001>

<llo_original>
// kernel: tpu_custom_call.1
$region0: #{tpu_custom_call.1}
  #allocation0 [shape = 'u32[]', space=smem, size = 0x4, offset = 0x4, fixed_abs, tag = 'smem constant byte address 0x4 - core index']
  #allocation1 [shape = 'u32[72,128]{1,0:T(1,128)}', space=vmem, size = 0x9000, scoped, tag = 'internal scratch']
  %s0 = inlined_call_operand.vmem [shape: f32[640,64], index: 0, kind: input, shape index: {}]
  %s1 = inlined_call_operand.vmem [shape: f32[64,1280], index: 1, kind: input, shape index: {}]
  %s2 = inlined_call_operand.vmem [shape: f32[1,1280], index: 2, kind: input, shape index: {}]
  %s3 = inlined_call_operand.vmem [shape: f32[1,1280], index: 3, kind: input, shape index: {}]
  %s4 = inlined_call_operand.vmem [shape: f32[2], index: 4, kind: input, shape index: {}]
  %s5 = inlined_call_operand.hbm [shape: f32[2,1,1280], index: 5, kind: output, shape index: {}]
  %s6 = sld [smem:[#allocation0]]
  $region57: #{tpu_custom_call.1} parent=0
    _
  %s8 = ssub.s32 1, %s6
  %s9 = scalar_select 0, %s8, %s6
  $region1: #{tpu_custom_call.1} parent=0
    #allocation2 [shape = 'u8[512]{0}', space=smem, size = 0x200, scoped, tag = 'input window, operand 4, single buffered']
    #allocation3 [shape = 's32[2]{0}', space=sflag, size = 0x8, scoped, tag = 'scoped memory for tpu_custom_call.1']
    #allocation4 [shape = 's32[2]{0}', space=sflag, size = 0x8, scoped, tag = 'scoped memory for tpu_custom_call.1']
    #allocation5 [shape = 'u8[10240]{0}', space=vmem, size = 0x2800, scoped, tag = 'output window, operand 0']
    %10 = vsyncpa [#allocation4], 0
    %11 = vsyncpa [#allocation3], 0
    %s12 = scalar_lea.sflag [#allocation3], 1
    %13 = vsyncpa %s12, 0
    loop: start=0, step=1, limit=4
    $region2: #{tpu_custom_call.1} parent=1 // loop_pre_header
      _
    $region3: #{tpu_custom_call.1} parent=1 // loop_header
      %s15 = sphi 0, %s19
      %p16 = scmp.ge.s32.totalorder %s15, 4
      %s25 = sphi 0, %s27
      %s28 = sphi 0, %s25
      %s29 = sphi 0, %s28
      %s45 = sphi 0, %s29
      %s49 = sphi 0, %s49
      %s51 = sphi 0, %s49
      %s52 = sphi 0, %s51
      %s66 = sphi 0, %s52
      %s70 = sphi 0, %s70
      %s72 = sphi 0, %s70
      %s73 = sphi 0, %s72
      %s87 = sphi 0, %s73
      %s91 = sphi 0, %s91
      %s93 = sphi 0, %s91
      %s94 = sphi 0, %s93
      %s108 = sphi 0, %s94
      %s112 = sphi 0, %s112
      %s114 = sphi 0, %s112
      %s115 = sphi 0, %s114
      %s129 = sphi 0, %s115
      %s135 = sphi 0, %s137
      %s138 = sphi 0, %s135
      %s139 = sphi 0, %s138
      %s155 = sphi 0, %s139
    $region4: #{tpu_custom_call.1} parent=1 // loop_header_branch
      %18 = sbr.rel (%p16) target = $region8
    $region5: #{tpu_custom_call.1} parent=1 // loop_body
      %s20 = ssub.s32 %s15, 1
      %s21 = ssub.s32 %s15, 2
      %s22 = sadd.s32 %s15, 1
      %s23 = ssub.s32 %s15, %s22
      %p24 = scmp.eq.s32.totalorder %s23, 0
      %s26 = sadd.s32 %s25, 1
      %s27 = scalar_select %p24, %s25, %s26
      %p30 = pneg %p24
      %p31 = scmp.eq.s32.totalorder %s15, 1
      %p32 = por %p30, %p31
      %p33 = scmp.ne.s32.totalorder %s25, %s28
      %p34 = scmp.eq.s32.totalorder %s15, 0
      %p35 = por %p33, %p34
      %p36 = scmp.ne.s32.totalorder %s25, %s28
      %p37 = scmp.eq.s32.totalorder %s20, 1
      %p38 = por %p36, %p37
      %p39 = scmp.ne.s32.totalorder %s28, %s29
      %p40 = scmp.eq.s32.totalorder %s20, 0
      %p41 = por %p39, %p40
      %p42 = scmp.ne.s32.totalorder %s28, %s29
      %p43 = scmp.eq.s32.totalorder %s21, 1
      %p44 = por %p42, %p43
      %p46 = scmp.ne.s32.totalorder %s29, %s45
      %p47 = scmp.eq.s32.totalorder %s21, 0
      %p48 = por %p46, %p47
      %s50 = sadd.s32 %s49, 1
      %p53 = scmp.eq.s32.totalorder %s15, 1
      %p54 = scmp.ne.s32.totalorder %s49, %s51
      %p55 = scmp.eq.s32.totalorder %s15, 0
      %p56 = por %p54, %p55
      %p57 = scmp.ne.s32.totalorder %s49, %s51
      %p58 = scmp.eq.s32.totalorder %s20, 1
      %p59 = por %p57, %p58
      %p60 = scmp.ne.s32.totalorder %s51, %s52
      %p61 = scmp.eq.s32.totalorder %s20, 0
      %p62 = por %p60, %p61
      %p63 = scmp.ne.s32.totalorder %s51, %s52
      %p64 = scmp.eq.s32.totalorder %s21, 1
      %p65 = por %p63, %p64
      %p67 = scmp.ne.s32.totalorder %s52, %s66
      %p68 = scmp.eq.s32.totalorder %s21, 0
      %p69 = por %p67, %p68
      %s71 = sadd.s32 %s70, 1
      %p74 = scmp.eq.s32.totalorder %s15, 1
      %p75 = scmp.ne.s32.totalorder %s70, %s72
      %p76 = scmp.eq.s32.totalorder %s15, 0
      %p77 = por %p75, %p76
      %p78 = scmp.ne.s32.totalorder %s70, %s72
      %p79 = scmp.eq.s32.totalorder %s20, 1
      %p80 = por %p78, %p79
      %p81 = scmp.ne.s32.totalorder %s72, %s73
      %p82 = scmp.eq.s32.totalorder %s20, 0
      %p83 = por %p81, %p82
      %p84 = scmp.ne.s32.totalorder %s72, %s73
      %p85 = scmp.eq.s32.totalorder %s21, 1
      %p86 = por %p84, %p85
      %p88 = scmp.ne.s32.totalorder %s73, %s87
      %p89 = scmp.eq.s32.totalorder %s21, 0
      %p90 = por %p88, %p89
      %s92 = sadd.s32 %s91, 1
      %p95 = scmp.eq.s32.totalorder %s15, 1
      %p96 = scmp.ne.s32.totalorder %s91, %s93
      %p97 = scmp.eq.s32.totalorder %s15, 0
      %p98 = por %p96, %p97
      %p99 = scmp.ne.s32.totalorder %s91, %s93
      %p100 = scmp.eq.s32.totalorder %s20, 1
      %p101 = por %p99, %p100
      %p102 = scmp.ne.s32.totalorder %s93, %s94
      %p103 = scmp.eq.s32.totalorder %s20, 0
      %p104 = por %p102, %p103
      %p105 = scmp.ne.s32.totalorder %s93, %s94
      %p106 = scmp.eq.s32.totalorder %s21, 1
      %p107 = por %p105, %p106
      %p109 = scmp.ne.s32.totalorder %s94, %s108
      %p110 = scmp.eq.s32.totalorder %s21, 0
      %p111 = por %p109, %p110
      %s113 = sadd.s32 %s112, 1
      %p116 = scmp.eq.s32.totalorder %s15, 1
      %p117 = scmp.ne.s32.totalorder %s112, %s114
      %p118 = scmp.eq.s32.totalorder %s15, 0
      %p119 = por %p117, %p118
      %p120 = scmp.ne.s32.totalorder %s112, %s114
      %p121 = scmp.eq.s32.totalorder %s20, 1
      %p122 = por %p120, %p121
      %p123 = scmp.ne.s32.totalorder %s114, %s115
      %p124 = scmp.eq.s32.totalorder %s20, 0
      %p125 = por %p123, %p124
      %p126 = scmp.ne.s32.totalorder %s114, %s115
      %p127 = scmp.eq.s32.totalorder %s21, 1
      %p128 = por %p126, %p127
      %p130 = scmp.ne.s32.totalorder %s115, %s129
      %p131 = scmp.eq.s32.totalorder %s21, 0
      %p132 = por %p130, %p131
      %s133 = ssub.s32 %s15, %s22
      %p134 = scmp.eq.s32.totalorder %s133, 0
      %s136 = sadd.s32 %s135, 1
      %s137 = scalar_select %p134, %s135, %s136
      %p140 = pneg %p134
      %p141 = scmp.eq.s32.totalorder %s15, 1
      %p142 = por %p140, %p141
      %p143 = scmp.ne.s32.totalorder %s135, %s138
      %p144 = scmp.eq.s32.totalorder %s15, 0
      %p145 = por %p143, %p144
      %p146 = scmp.ne.s32.totalorder %s135, %s138
      %p147 = scmp.eq.s32.totalorder %s20, 1
      %p148 = por %p146, %p147
      %p149 = scmp.ne.s32.totalorder %s138, %s139
      %p150 = scmp.eq.s32.totalorder %s20, 0
      %p151 = por %p149, %p150
      %p152 = scmp.ne.s32.totalorder %s138, %s139
      %p153 = scmp.eq.s32.totalorder %s21, 1
      %p154 = por %p152, %p153
      %p156 = scmp.ne.s32.totalorder %s139, %s155
      %p157 = scmp.eq.s32.totalorder %s21, 0
      %p158 = por %p156, %p157
      %p159 = scmp.le.s32.totalorder 1, %s15
      %p160 = scmp.lt.s32.totalorder %s15, 3
      %p161 = pnand %p159, %p160
      %p162 = pneg %p161
      // Predicated region
      $region9: #{tpu_custom_call.1} parent=5 // pred_check
        _
      $region10: #{tpu_custom_call.1} parent=5 // pred_check_branch
        %164 = sbr.rel (%p161) target = $region12
      $region11: #{tpu_custom_call.1} parent=5 // pred_region
        %s165 = ssub.s32 %s15, 1
        // Predicated region
        $region13: #{tpu_custom_call.1} parent=11 // pred_check
          %p166 = pneg %p62
        $region14: #{tpu_custom_call.1} parent=11 // pred_check_branch
          %168 = sbr.rel (%p166) target = $region16
        $region15: #{tpu_custom_call.1} parent=11 // pred_region
          _
        $region16: #{tpu_custom_call.1} parent=11 // pred_fallthru
          _
        // Predicated region
        $region17: #{tpu_custom_call.1} parent=11 // pred_check
          %p169 = pneg %p83
        $region18: #{tpu_custom_call.1} parent=11 // pred_check_branch
          %171 = sbr.rel (%p169) target = $region20
        $region19: #{tpu_custom_call.1} parent=11 // pred_region
          _
        $region20: #{tpu_custom_call.1} parent=11 // pred_fallthru
          _
        // Predicated region
        $region21: #{tpu_custom_call.1} parent=11 // pred_check
          %p172 = pneg %p104
        $region22: #{tpu_custom_call.1} parent=11 // pred_check_branch
          %174 = sbr.rel (%p172) target = $region24
        $region23: #{tpu_custom_call.1} parent=11 // pred_region
          _
        $region24: #{tpu_custom_call.1} parent=11 // pred_fallthru
          _
        // Predicated region
        $region25: #{tpu_custom_call.1} parent=11 // pred_check
          %p175 = pneg %p125
        $region26: #{tpu_custom_call.1} parent=11 // pred_check_branch
          %177 = sbr.rel (%p175) target = $region28
        $region27: #{tpu_custom_call.1} parent=11 // pred_region
          %179 = vsyncadd [#allocation4], 0
          %s181 = sshll.u32 %s4, 4
          %s182 = int_to_ptr.vmem [resolvable:$true] %s181
          %184 = dma.vmem_to_smem %s182, 16, [#allocation2], [#allocation4]
        $region28: #{tpu_custom_call.1} parent=11 // pred_fallthru
          _
      $region12: #{tpu_custom_call.1} parent=5 // pred_fallthru
        _
      %p185 = scmp.lt.s32.totalorder %s15, 2
      // Predicated region
      $region29: #{tpu_custom_call.1} parent=5 // pred_check
        %p186 = pneg %p185
      $region30: #{tpu_custom_call.1} parent=5 // pred_check_branch
        %188 = sbr.rel (%p186) target = $region32
      $region31: #{tpu_custom_call.1} parent=5 // pred_region
        // Predicated region
        $region33: #{tpu_custom_call.1} parent=31 // pred_check
          %p189 = pneg %p35
        $region34: #{tpu_custom_call.1} parent=31 // pred_check_branch
          %191 = sbr.rel (%p189) target = $region36
        $region35: #{tpu_custom_call.1} parent=31 // pred_region
          %s192 = smul.u32 40, %s15
          %p193 = scmp.lt.s32.totalorder %s192, 79
          %s194 = scalar_select %p193, %s192, 79
          %s195 = smul.addr %s194, 8
          %s196 = scalar_lea.vmem %s0, %s195
          %s197 = smul.u32 40, %s15
        $region36: #{tpu_custom_call.1} parent=31 // pred_fallthru
          _
      $region32: #{tpu_custom_call.1} parent=5 // pred_fallthru
        _
      %p198 = scmp.le.s32.totalorder 1, %s15
      %p199 = scmp.lt.s32.totalorder %s15, 3
      %p200 = pnand %p198, %p199
      %p201 = pneg %p200
      // Predicated region
      $region37: #{tpu_custom_call.1} parent=5 // pred_check
        _
      $region38: #{tpu_custom_call.1} parent=5 // pred_check_branch
        %203 = sbr.rel (%p200) target = $region40
      $region39: #{tpu_custom_call.1} parent=5 // pred_region
        %s204 = ssub.s32 %s15, 1
        // Predicated region
        $region41: #{tpu_custom_call.1} parent=39 // pred_check
          %p205 = pneg %p125
        $region42: #{tpu_custom_call.1} parent=39 // pred_check_branch
          %207 = sbr.rel (%p205) target = $region44
        $region43: #{tpu_custom_call.1} parent=39 // pred_region
          %209 = dma.done [#allocation4], 16
        $region44: #{tpu_custom_call.1} parent=39 // pred_fallthru
          _
        %210 = sfence
        %s211 = smul.u32 40, %s20
        %p212 = scmp.lt.s32.totalorder %s211, 79
        %s213 = scalar_select %p212, %s211, 79
        %s214 = smul.addr %s213, 8
        %s215 = scalar_lea.vmem %s0, %s214
        %p216 = pneg %p41
        %p217 = pneg %p38
        %p218 = pneg %p62
        %p219 = pneg %p59
        %p220 = pneg %p83
        %p221 = pneg %p80
        %p222 = pneg %p104
        %p223 = pneg %p101
        %p224 = pneg %p125
        %p225 = pneg %p122
        %p226 = pneg %p151
        %p227 = pneg %p148
        %s228 = sand.u32 %s138, 1
        %s229 = scalar_lea.sflag [#allocation3], %s228
        %s230 = sand.u32 %s138, 1
        %s231 = smul.addr %s230, 10
        %s232 = scalar_lea.vmem [#allocation5], %s231
        %s233 = smul.u32 40, %s20
        %p234 = scmp.lt.s32.totalorder %s233, 79
        %s235 = scalar_select %p234, %s233, 79
        %s236 = smul.addr %s235, 8
        %s237 = scalar_lea.vmem %s0, %s236
        %s238 = smul.u32 40, %s20
        %v239 = vld [vmem:[%s237] sm:$0xff]
        %v240 = vld [vmem:[%s237 + $0x8] sm:$0xff]
        %v241 = vld [vmem:[%s237 + $0x10] sm:$0xff]
        %v242 = vld [vmem:[%s237 + $0x18] sm:$0xff]
        %v243 = vld [vmem:[%s237 + $0x20] sm:$0xff]
        %v244 = vld [vmem:[%s237 + $0x28] sm:$0xff]
        %v245 = vld [vmem:[%s237 + $0x30] sm:$0xff]
        %v246 = vld [vmem:[%s237 + $0x38] sm:$0xff]
        %v247 = vld [vmem:[%s237 + $0x40] sm:$0xff]
        %v248 = vld [vmem:[%s237 + $0x48] sm:$0xff]
        %v249 = vld [vmem:[%s237 + $0x50] sm:$0xff]
        %v250 = vld [vmem:[%s237 + $0x58] sm:$0xff]
        %v251 = vld [vmem:[%s237 + $0x60] sm:$0xff]
        %v252 = vld [vmem:[%s237 + $0x68] sm:$0xff]
        %v253 = vld [vmem:[%s237 + $0x70] sm:$0xff]
        %v254 = vld [vmem:[%s237 + $0x78] sm:$0xff]
        %v255 = vld [vmem:[%s237 + $0x80] sm:$0xff]
        %v256 = vld [vmem:[%s237 + $0x88] sm:$0xff]
        %v257 = vld [vmem:[%s237 + $0x90] sm:$0xff]
        %v258 = vld [vmem:[%s237 + $0x98] sm:$0xff]
        %v259 = vld [vmem:[%s237 + $0xa0] sm:$0xff]
        %v260 = vld [vmem:[%s237 + $0xa8] sm:$0xff]
        %v261 = vld [vmem:[%s237 + $0xb0] sm:$0xff]
        %v262 = vld [vmem:[%s237 + $0xb8] sm:$0xff]
        %v263 = vld [vmem:[%s237 + $0xc0] sm:$0xff]
        %v264 = vld [vmem:[%s237 + $0xc8] sm:$0xff]
        %v265 = vld [vmem:[%s237 + $0xd0] sm:$0xff]
        %v266 = vld [vmem:[%s237 + $0xd8] sm:$0xff]
        %v267 = vld [vmem:[%s237 + $0xe0] sm:$0xff]
        %v268 = vld [vmem:[%s237 + $0xe8] sm:$0xff]
        %v269 = vld [vmem:[%s237 + $0xf0] sm:$0xff]
        %v270 = vld [vmem:[%s237 + $0xf8] sm:$0xff]
        %v271 = vld [vmem:[%s237 + $0x100] sm:$0xff]
        %v272 = vld [vmem:[%s237 + $0x108] sm:$0xff]
        %v273 = vld [vmem:[%s237 + $0x110] sm:$0xff]
        %v274 = vld [vmem:[%s237 + $0x118] sm:$0xff]
        %v275 = vld [vmem:[%s237 + $0x120] sm:$0xff]
        %v276 = vld [vmem:[%s237 + $0x128] sm:$0xff]
        %v277 = vld [vmem:[%s237 + $0x130] sm:$0xff]
        %v278 = vld [vmem:[%s237 + $0x138] sm:$0xff]
        %v279 = vld [vmem:[%s1] sm:$0xff]
        %v280 = vld [vmem:[%s1 + $0x8] sm:$0xff]
        %v281 = vld [vmem:[%s1 + $0x10] sm:$0xff]
        %v282 = vld [vmem:[%s1 + $0x18] sm:$0xff]
        %v283 = vld [vmem:[%s1 + $0x20] sm:$0xff]
        %v284 = vld [vmem:[%s1 + $0x28] sm:$0xff]
        %v285 = vld [vmem:[%s1 + $0x30] sm:$0xff]
        %v286 = vld [vmem:[%s1 + $0x38] sm:$0xff]
        %v287 = vld [vmem:[%s1 + $0x40] sm:$0xff]
        %v288 = vld [vmem:[%s1 + $0x48] sm:$0xff]
        %v289 = vld [vmem:[%s1 + $0x50] sm:$0xff]
        %v290 = vld [vmem:[%s1 + $0x58] sm:$0xff]
        %v291 = vld [vmem:[%s1 + $0x60] sm:$0xff]
        %v292 = vld [vmem:[%s1 + $0x68] sm:$0xff]
        %v293 = vld [vmem:[%s1 + $0x70] sm:$0xff]
        %v294 = vld [vmem:[%s1 + $0x78] sm:$0xff]
        %v295 = vld [vmem:[%s1 + $0x80] sm:$0xff]
        %v296 = vld [vmem:[%s1 + $0x88] sm:$0xff]
        %v297 = vld [vmem:[%s1 + $0x90] sm:$0xff]
        %v298 = vld [vmem:[%s1 + $0x98] sm:$0xff]
        %v299 = vld [vmem:[%s1 + $0xa0] sm:$0xff]
        %v300 = vld [vmem:[%s1 + $0xa8] sm:$0xff]
        %v301 = vld [vmem:[%s1 + $0xb0] sm:$0xff]
        %v302 = vld [vmem:[%s1 + $0xb8] sm:$0xff]
        %v303 = vld [vmem:[%s1 + $0xc0] sm:$0xff]
        %v304 = vld [vmem:[%s1 + $0xc8] sm:$0xff]
        %v305 = vld [vmem:[%s1 + $0xd0] sm:$0xff]
        %v306 = vld [vmem:[%s1 + $0xd8] sm:$0xff]
        %v307 = vld [vmem:[%s1 + $0xe0] sm:$0xff]
        %v308 = vld [vmem:[%s1 + $0xe8] sm:$0xff]
        %v309 = vld [vmem:[%s1 + $0xf0] sm:$0xff]
        %v310 = vld [vmem:[%s1 + $0xf8] sm:$0xff]
        %v311 = vld [vmem:[%s1 + $0x100] sm:$0xff]
        %v312 = vld [vmem:[%s1 + $0x108] sm:$0xff]
        %v313 = vld [vmem:[%s1 + $0x110] sm:$0xff]
        %v314 = vld [vmem:[%s1 + $0x118] sm:$0xff]
        %v315 = vld [vmem:[%s1 + $0x120] sm:$0xff]
        %v316 = vld [vmem:[%s1 + $0x128] sm:$0xff]
        %v317 = vld [vmem:[%s1 + $0x130] sm:$0xff]
        %v318 = vld [vmem:[%s1 + $0x138] sm:$0xff]
        %v319 = vld [vmem:[%s1 + $0x140] sm:$0xff]
        %v320 = vld [vmem:[%s1 + $0x148] sm:$0xff]
        %v321 = vld [vmem:[%s1 + $0x150] sm:$0xff]
        %v322 = vld [vmem:[%s1 + $0x158] sm:$0xff]
        %v323 = vld [vmem:[%s1 + $0x160] sm:$0xff]
        %v324 = vld [vmem:[%s1 + $0x168] sm:$0xff]
        %v325 = vld [vmem:[%s1 + $0x170] sm:$0xff]
        %v326 = vld [vmem:[%s1 + $0x178] sm:$0xff]
        %v327 = vld [vmem:[%s1 + $0x180] sm:$0xff]
        %v328 = vld [vmem:[%s1 + $0x188] sm:$0xff]
        %v329 = vld [vmem:[%s1 + $0x190] sm:$0xff]
        %v330 = vld [vmem:[%s1 + $0x198] sm:$0xff]
        %v331 = vld [vmem:[%s1 + $0x1a0] sm:$0xff]
        %v332 = vld [vmem:[%s1 + $0x1a8] sm:$0xff]
        %v333 = vld [vmem:[%s1 + $0x1b0] sm:$0xff]
        %v334 = vld [vmem:[%s1 + $0x1b8] sm:$0xff]
        %v335 = vld [vmem:[%s1 + $0x1c0] sm:$0xff]
        %v336 = vld [vmem:[%s1 + $0x1c8] sm:$0xff]
        %v337 = vld [vmem:[%s1 + $0x1d0] sm:$0xff]
        %v338 = vld [vmem:[%s1 + $0x1d8] sm:$0xff]
        %v339 = vld [vmem:[%s1 + $0x1e0] sm:$0xff]
        %v340 = vld [vmem:[%s1 + $0x1e8] sm:$0xff]
        %v341 = vld [vmem:[%s1 + $0x1f0] sm:$0xff]
        %v342 = vld [vmem:[%s1 + $0x1f8] sm:$0xff]
        %v343 = vld [vmem:[%s1 + $0x200] sm:$0xff]
        %v344 = vld [vmem:[%s1 + $0x208] sm:$0xff]
        %v345 = vld [vmem:[%s1 + $0x210] sm:$0xff]
        %v346 = vld [vmem:[%s1 + $0x218] sm:$0xff]
        %v347 = vld [vmem:[%s1 + $0x220] sm:$0xff]
        %v348 = vld [vmem:[%s1 + $0x228] sm:$0xff]
        %v349 = vld [vmem:[%s1 + $0x230] sm:$0xff]
        %v350 = vld [vmem:[%s1 + $0x238] sm:$0xff]
        %v351 = vld [vmem:[%s1 + $0x240] sm:$0xff]
        %v352 = vld [vmem:[%s1 + $0x248] sm:$0xff]
        %v353 = vld [vmem:[%s1 + $0x250] sm:$0xff]
        %v354 = vld [vmem:[%s1 + $0x258] sm:$0xff]
        %v355 = vld [vmem:[%s1 + $0x260] sm:$0xff]
        %v356 = vld [vmem:[%s1 + $0x268] sm:$0xff]
        %v357 = vld [vmem:[%s1 + $0x270] sm:$0xff]
        %v358 = vld [vmem:[%s1 + $0x278] sm:$0xff]
        %vm359 = vcmask 523264
        %v361 = vsel %vm359, %v239, 0
        %v364 = vsel %vm359, %v240, 0
        %v367 = vsel %vm359, %v241, 0
        %v370 = vsel %vm359, %v242, 0
        %v373 = vsel %vm359, %v243, 0
        %v376 = vsel %vm359, %v244, 0
        %v379 = vsel %vm359, %v245, 0
        %v382 = vsel %vm359, %v246, 0
        %v385 = vsel %vm359, %v247, 0
        %v388 = vsel %vm359, %v248, 0
        %v391 = vsel %vm359, %v249, 0
        %v394 = vsel %vm359, %v250, 0
        %v397 = vsel %vm359, %v251, 0
        %v400 = vsel %vm359, %v252, 0
        %v403 = vsel %vm359, %v253, 0
        %v406 = vsel %vm359, %v254, 0
        %v409 = vsel %vm359, %v255, 0
        %v412 = vsel %vm359, %v256, 0
        %v415 = vsel %vm359, %v257, 0
        %v418 = vsel %vm359, %v258, 0
        %v421 = vsel %vm359, %v259, 0
        %v424 = vsel %vm359, %v260, 0
        %v427 = vsel %vm359, %v261, 0
        %v430 = vsel %vm359, %v262, 0
        %v433 = vsel %vm359, %v263, 0
        %v436 = vsel %vm359, %v264, 0
        %v439 = vsel %vm359, %v265, 0
        %v442 = vsel %vm359, %v266, 0
        %v445 = vsel %vm359, %v267, 0
        %v448 = vsel %vm359, %v268, 0
        %v451 = vsel %vm359, %v269, 0
        %v454 = vsel %vm359, %v270, 0
        %v457 = vsel %vm359, %v271, 0
        %v460 = vsel %vm359, %v272, 0
        %v463 = vsel %vm359, %v273, 0
        %v466 = vsel %vm359, %v274, 0
        %v469 = vsel %vm359, %v275, 0
        %v472 = vsel %vm359, %v276, 0
        %v475 = vsel %vm359, %v277, 0
        %v478 = vsel %vm359, %v278, 0
        %480 = vmatpush.msra.mxu0 0.0
        %481 = vmatpush.msra.mxu0 0.0
        %482 = vmatpush.msra.mxu0 0.0
        %483 = vmatpush.msra.mxu0 0.0
        %484 = vmatpush.msra.mxu0 0.0
        %485 = vmatpush.msra.mxu0 0.0
        %486 = vmatpush.msra.mxu0 0.0
        %487 = vmatpush.msra.mxu0 0.0
        %488 = vmatpush.msra.mxu0 %v349
        %489 = vmatpush.msra.mxu0 %v339
        %490 = vmatpush.msra.mxu0 %v329
        %491 = vmatpush.msra.mxu0 %v319
        %492 = vmatpush.msra.mxu0 %v309
        %493 = vmatpush.msra.mxu0 %v299
        %494 = vmatpush.msra.mxu0 %v289
        %495 = vmatpush.msra.mxu0 %v279
        %496 = vmatmul.f32.gmra.mxu0 %v361
        %v497 = vpop.f32.mrf.mxu0
        %v498 = vadd.f32 0.0, %v497
        %499 = vmatmul.f32.gmra.mxu0 %v364
        %v500 = vpop.f32.mrf.mxu0
        %v501 = vadd.f32 0.0, %v500
        %502 = vmatmul.f32.gmra.mxu0 %v367
        %v503 = vpop.f32.mrf.mxu0
        %v504 = vadd.f32 0.0, %v503
        %505 = vmatmul.f32.gmra.mxu0 %v370
        %v506 = vpop.f32.mrf.mxu0
        %v507 = vadd.f32 0.0, %v506
        %508 = vmatmul.f32.gmra.mxu0 %v373
        %v509 = vpop.f32.mrf.mxu0
        %v510 = vadd.f32 0.0, %v509
        %511 = vmatmul.f32.gmra.mxu0 %v376
        %v512 = vpop.f32.mrf.mxu0
        %v513 = vadd.f32 0.0, %v512
        %514 = vmatmul.f32.gmra.mxu0 %v379
        %v515 = vpop.f32.mrf.mxu0
        %v516 = vadd.f32 0.0, %v515
        %517 = vmatmul.f32.gmra.mxu0 %v382
        %v518 = vpop.f32.mrf.mxu0
        %v519 = vadd.f32 0.0, %v518
        %520 = vmatmul.f32.gmra.mxu0 %v385
        %v521 = vpop.f32.mrf.mxu0
        %v522 = vadd.f32 0.0, %v521
        %523 = vmatmul.f32.gmra.mxu0 %v388
        %v524 = vpop.f32.mrf.mxu0
        %v525 = vadd.f32 0.0, %v524
        %526 = vmatmul.f32.gmra.mxu0 %v391
        %v527 = vpop.f32.mrf.mxu0
        %v528 = vadd.f32 0.0, %v527
        %529 = vmatmul.f32.gmra.mxu0 %v394
        %v530 = vpop.f32.mrf.mxu0
        %v531 = vadd.f32 0.0, %v530
        %532 = vmatmul.f32.gmra.mxu0 %v397
        %v533 = vpop.f32.mrf.mxu0
        %v534 = vadd.f32 0.0, %v533
        %535 = vmatmul.f32.gmra.mxu0 %v400
        %v536 = vpop.f32.mrf.mxu0
        %v537 = vadd.f32 0.0, %v536
        %538 = vmatmul.f32.gmra.mxu0 %v403
        %v539 = vpop.f32.mrf.mxu0
        %v540 = vadd.f32 0.0, %v539
        %541 = vmatmul.f32.gmra.mxu0 %v406
        %v542 = vpop.f32.mrf.mxu0
        %v543 = vadd.f32 0.0, %v542
        %544 = vmatmul.f32.gmra.mxu0 %v409
        %v545 = vpop.f32.mrf.mxu0
        %v546 = vadd.f32 0.0, %v545
        %547 = vmatmul.f32.gmra.mxu0 %v412
        %v548 = vpop.f32.mrf.mxu0
        %v549 = vadd.f32 0.0, %v548
        %550 = vmatmul.f32.gmra.mxu0 %v415
        %v551 = vpop.f32.mrf.mxu0
        %v552 = vadd.f32 0.0, %v551
        %553 = vmatmul.f32.gmra.mxu0 %v418
        %v554 = vpop.f32.mrf.mxu0
        %v555 = vadd.f32 0.0, %v554
        %556 = vmatmul.f32.gmra.mxu0 %v421
        %v557 = vpop.f32.mrf.mxu0
        %v558 = vadd.f32 0.0, %v557
        %559 = vmatmul.f32.gmra.mxu0 %v424
        %v560 = vpop.f32.mrf.mxu0
        %v561 = vadd.f32 0.0, %v560
        %562 = vmatmul.f32.gmra.mxu0 %v427
        %v563 = vpop.f32.mrf.mxu0
        %v564 = vadd.f32 0.0, %v563
        %565 = vmatmul.f32.gmra.mxu0 %v430
        %v566 = vpop.f32.mrf.mxu0
        %v567 = vadd.f32 0.0, %v566
        %568 = vmatmul.f32.gmra.mxu0 %v433
        %v569 = vpop.f32.mrf.mxu0
        %v570 = vadd.f32 0.0, %v569
        %571 = vmatmul.f32.gmra.mxu0 %v436
        %v572 = vpop.f32.mrf.mxu0
        %v573 = vadd.f32 0.0, %v572
        %574 = vmatmul.f32.gmra.mxu0 %v439
        %v575 = vpop.f32.mrf.mxu0
        %v576 = vadd.f32 0.0, %v575
        %577 = vmatmul.f32.gmra.mxu0 %v442
        %v578 = vpop.f32.mrf.mxu0
        %v579 = vadd.f32 0.0, %v578
        %580 = vmatmul.f32.gmra.mxu0 %v445
        %v581 = vpop.f32.mrf.mxu0
        %v582 = vadd.f32 0.0, %v581
        %583 = vmatmul.f32.gmra.mxu0 %v448
        %v584 = vpop.f32.mrf.mxu0
        %v585 = vadd.f32 0.0, %v584
        %586 = vmatmul.f32.gmra.mxu0 %v451
        %v587 = vpop.f32.mrf.mxu0
        %v588 = vadd.f32 0.0, %v587
        %589 = vmatmul.f32.gmra.mxu0 %v454
        %v590 = vpop.f32.mrf.mxu0
        %v591 = vadd.f32 0.0, %v590
        %592 = vmatmul.f32.gmra.mxu0 %v457
        %v593 = vpop.f32.mrf.mxu0
        %v594 = vadd.f32 0.0, %v593
        %595 = vmatmul.f32.gmra.mxu0 %v460
        %v596 = vpop.f32.mrf.mxu0
        %v597 = vadd.f32 0.0, %v596
        %598 = vmatmul.f32.gmra.mxu0 %v463
        %v599 = vpop.f32.mrf.mxu0
        %v600 = vadd.f32 0.0, %v599
        %601 = vmatmul.f32.gmra.mxu0 %v466
        %v602 = vpop.f32.mrf.mxu0
        %v603 = vadd.f32 0.0, %v602
        %604 = vmatmul.f32.gmra.mxu0 %v469
        %v605 = vpop.f32.mrf.mxu0
        %v606 = vadd.f32 0.0, %v605
        %607 = vmatmul.f32.gmra.mxu0 %v472
        %v608 = vpop.f32.mrf.mxu0
        %v609 = vadd.f32 0.0, %v608
        %610 = vmatmul.f32.gmra.mxu0 %v475
        %v611 = vpop.f32.mrf.mxu0
        %v612 = vadd.f32 0.0, %v611
        %613 = vmatmul.f32.gmra.mxu0 %v478
        %v614 = vpop.f32.mrf.mxu0
        %v615 = vadd.f32 0.0, %v614
        %616 = vdwg.mxu0
        %617 = vmatpush.msra.mxu0 0.0
        %618 = vmatpush.msra.mxu0 0.0
        %619 = vmatpush.msra.mxu0 0.0
        %620 = vmatpush.msra.mxu0 0.0
        %621 = vmatpush.msra.mxu0 0.0
        %622 = vmatpush.msra.mxu0 0.0
        %623 = vmatpush.msra.mxu0 0.0
        %624 = vmatpush.msra.mxu0 0.0
        %625 = vmatpush.msra.mxu0 %v350
        %626 = vmatpush.msra.mxu0 %v340
        %627 = vmatpush.msra.mxu0 %v330
        %628 = vmatpush.msra.mxu0 %v320
        %629 = vmatpush.msra.mxu0 %v310
        %630 = vmatpush.msra.mxu0 %v300
        %631 = vmatpush.msra.mxu0 %v290
        %632 = vmatpush.msra.mxu0 %v280
        %633 = vmatmul.f32.gmra.mxu0 %v361
        %v634 = vpop.f32.mrf.mxu0
        %v635 = vadd.f32 0.0, %v634
        %636 = vmatmul.f32.gmra.mxu0 %v364
        %v637 = vpop.f32.mrf.mxu0
        %v638 = vadd.f32 0.0, %v637
        %639 = vmatmul.f32.gmra.mxu0 %v367
        %v640 = vpop.f32.mrf.mxu0
        %v641 = vadd.f32 0.0, %v640
        %642 = vmatmul.f32.gmra.mxu0 %v370
        %v643 = vpop.f32.mrf.mxu0
        %v644 = vadd.f32 0.0, %v643
        %645 = vmatmul.f32.gmra.mxu0 %v373
        %v646 = vpop.f32.mrf.mxu0
        %v647 = vadd.f32 0.0, %v646
        %648 = vmatmul.f32.gmra.mxu0 %v376
        %v649 = vpop.f32.mrf.mxu0
        %v650 = vadd.f32 0.0, %v649
        %651 = vmatmul.f32.gmra.mxu0 %v379
        %v652 = vpop.f32.mrf.mxu0
        %v653 = vadd.f32 0.0, %v652
        %654 = vmatmul.f32.gmra.mxu0 %v382
        %v655 = vpop.f32.mrf.mxu0
        %v656 = vadd.f32 0.0, %v655
        %657 = vmatmul.f32.gmra.mxu0 %v385
        %v658 = vpop.f32.mrf.mxu0
        %v659 = vadd.f32 0.0, %v658
        %660 = vmatmul.f32.gmra.mxu0 %v388
        %v661 = vpop.f32.mrf.mxu0
        %v662 = vadd.f32 0.0, %v661
        %663 = vmatmul.f32.gmra.mxu0 %v391
        %v664 = vpop.f32.mrf.mxu0
        %v665 = vadd.f32 0.0, %v664
        %666 = vmatmul.f32.gmra.mxu0 %v394
        %v667 = vpop.f32.mrf.mxu0
        %v668 = vadd.f32 0.0, %v667
        %669 = vmatmul.f32.gmra.mxu0 %v397
        %v670 = vpop.f32.mrf.mxu0
        %v671 = vadd.f32 0.0, %v670
        %672 = vmatmul.f32.gmra.mxu0 %v400
        %v673 = vpop.f32.mrf.mxu0
        %v674 = vadd.f32 0.0, %v673
        %675 = vmatmul.f32.gmra.mxu0 %v403
        %v676 = vpop.f32.mrf.mxu0
        %v677 = vadd.f32 0.0, %v676
        %678 = vmatmul.f32.gmra.mxu0 %v406
        %v679 = vpop.f32.mrf.mxu0
        %v680 = vadd.f32 0.0, %v679
        %681 = vmatmul.f32.gmra.mxu0 %v409
        %v682 = vpop.f32.mrf.mxu0
        %v683 = vadd.f32 0.0, %v682
        %684 = vmatmul.f32.gmra.mxu0 %v412
        %v685 = vpop.f32.mrf.mxu0
        %v686 = vadd.f32 0.0, %v685
        %687 = vmatmul.f32.gmra.mxu0 %v415
        %v688 = vpop.f32.mrf.mxu0
        %v689 = vadd.f32 0.0, %v688
        %690 = vmatmul.f32.gmra.mxu0 %v418
        %v691 = vpop.f32.mrf.mxu0
        %v692 = vadd.f32 0.0, %v691
        %693 = vmatmul.f32.gmra.mxu0 %v421
        %v694 = vpop.f32.mrf.mxu0
        %v695 = vadd.f32 0.0, %v694
        %696 = vmatmul.f32.gmra.mxu0 %v424
        %v697 = vpop.f32.mrf.mxu0
        %v698 = vadd.f32 0.0, %v697
        %699 = vmatmul.f32.gmra.mxu0 %v427
        %v700 = vpop.f32.mrf.mxu0
        %v701 = vadd.f32 0.0, %v700
        %702 = vmatmul.f32.gmra.mxu0 %v430
        %v703 = vpop.f32.mrf.mxu0
        %v704 = vadd.f32 0.0, %v703
        %705 = vmatmul.f32.gmra.mxu0 %v433
        %v706 = vpop.f32.mrf.mxu0
        %v707 = vadd.f32 0.0, %v706
        %708 = vmatmul.f32.gmra.mxu0 %v436
        %v709 = vpop.f32.mrf.mxu0
        %v710 = vadd.f32 0.0, %v709
        %711 = vmatmul.f32.gmra.mxu0 %v439
        %v712 = vpop.f32.mrf.mxu0
        %v713 = vadd.f32 0.0, %v712
        %714 = vmatmul.f32.gmra.mxu0 %v442
        %v715 = vpop.f32.mrf.mxu0
        %v716 = vadd.f32 0.0, %v715
        %717 = vmatmul.f32.gmra.mxu0 %v445
        %v718 = vpop.f32.mrf.mxu0
        %v719 = vadd.f32 0.0, %v718
        %720 = vmatmul.f32.gmra.mxu0 %v448
        %v721 = vpop.f32.mrf.mxu0
        %v722 = vadd.f32 0.0, %v721
        %723 = vmatmul.f32.gmra.mxu0 %v451
        %v724 = vpop.f32.mrf.mxu0
        %v725 = vadd.f32 0.0, %v724
        %726 = vmatmul.f32.gmra.mxu0 %v454
        %v727 = vpop.f32.mrf.mxu0
        %v728 = vadd.f32 0.0, %v727
        %729 = vmatmul.f32.gmra.mxu0 %v457
        %v730 = vpop.f32.mrf.mxu0
        %v731 = vadd.f32 0.0, %v730
        %732 = vmatmul.f32.gmra.mxu0 %v460
        %v733 = vpop.f32.mrf.mxu0
        %v734 = vadd.f32 0.0, %v733
        %735 = vmatmul.f32.gmra.mxu0 %v463
        %v736 = vpop.f32.mrf.mxu0
        %v737 = vadd.f32 0.0, %v736
        %738 = vmatmul.f32.gmra.mxu0 %v466
        %v739 = vpop.f32.mrf.mxu0
        %v740 = vadd.f32 0.0, %v739
        %741 = vmatmul.f32.gmra.mxu0 %v469
        %v742 = vpop.f32.mrf.mxu0
        %v743 = vadd.f32 0.0, %v742
        %744 = vmatmul.f32.gmra.mxu0 %v472
        %v745 = vpop.f32.mrf.mxu0
        %v746 = vadd.f32 0.0, %v745
        %747 = vmatmul.f32.gmra.mxu0 %v475
        %v748 = vpop.f32.mrf.mxu0
        %v749 = vadd.f32 0.0, %v748
        %750 = vmatmul.f32.gmra.mxu0 %v478
        %v751 = vpop.f32.mrf.mxu0
        %v752 = vadd.f32 0.0, %v751
        %753 = vdwg.mxu0
        %754 = vmatpush.msra.mxu0 0.0
        %755 = vmatpush.msra.mxu0 0.0
        %756 = vmatpush.msra.mxu0 0.0
        %757 = vmatpush.msra.mxu0 0.0
        %758 = vmatpush.msra.mxu0 0.0
        %759 = vmatpush.msra.mxu0 0.0
        %760 = vmatpush.msra.mxu0 0.0
        %761 = vmatpush.msra.mxu0 0.0
        %762 = vmatpush.msra.mxu0 %v351
        %763 = vmatpush.msra.mxu0 %v341
        %764 = vmatpush.msra.mxu0 %v331
        %765 = vmatpush.msra.mxu0 %v321
        %766 = vmatpush.msra.mxu0 %v311
        %767 = vmatpush.msra.mxu0 %v301
        %768 = vmatpush.msra.mxu0 %v291
        %769 = vmatpush.msra.mxu0 %v281
        %770 = vmatmul.f32.gmra.mxu0 %v361
        %v771 = vpop.f32.mrf.mxu0
        %v772 = vadd.f32 0.0, %v771
        %773 = vmatmul.f32.gmra.mxu0 %v364
        %v774 = vpop.f32.mrf.mxu0
        %v775 = vadd.f32 0.0, %v774
        %776 = vmatmul.f32.gmra.mxu0 %v367
        %v777 = vpop.f32.mrf.mxu0
        %v778 = vadd.f32 0.0, %v777
        %779 = vmatmul.f32.gmra.mxu0 %v370
        %v780 = vpop.f32.mrf.mxu0
        %v781 = vadd.f32 0.0, %v780
        %782 = vmatmul.f32.gmra.mxu0 %v373
        %v783 = vpop.f32.mrf.mxu0
        %v784 = vadd.f32 0.0, %v783
        %785 = vmatmul.f32.gmra.mxu0 %v376
        %v786 = vpop.f32.mrf.mxu0
        %v787 = vadd.f32 0.0, %v786
        %788 = vmatmul.f32.gmra.mxu0 %v379
        %v789 = vpop.f32.mrf.mxu0
        %v790 = vadd.f32 0.0, %v789
        %791 = vmatmul.f32.gmra.mxu0 %v382
        %v792 = vpop.f32.mrf.mxu0
        %v793 = vadd.f32 0.0, %v792
        %794 = vmatmul.f32.gmra.mxu0 %v385
        %v795 = vpop.f32.mrf.mxu0
        %v796 = vadd.f32 0.0, %v795
        %797 = vmatmul.f32.gmra.mxu0 %v388
        %v798 = vpop.f32.mrf.mxu0
        %v799 = vadd.f32 0.0, %v798
        %800 = vmatmul.f32.gmra.mxu0 %v391
        %v801 = vpop.f32.mrf.mxu0
        %v802 = vadd.f32 0.0, %v801
        %803 = vmatmul.f32.gmra.mxu0 %v394
        %v804 = vpop.f32.mrf.mxu0
        %v805 = vadd.f32 0.0, %v804
        %806 = vmatmul.f32.gmra.mxu0 %v397
        %v807 = vpop.f32.mrf.mxu0
        %v808 = vadd.f32 0.0, %v807
        %809 = vmatmul.f32.gmra.mxu0 %v400
        %v810 = vpop.f32.mrf.mxu0
        %v811 = vadd.f32 0.0, %v810
        %812 = vmatmul.f32.gmra.mxu0 %v403
        %v813 = vpop.f32.mrf.mxu0
        %v814 = vadd.f32 0.0, %v813
        %815 = vmatmul.f32.gmra.mxu0 %v406
        %v816 = vpop.f32.mrf.mxu0
        %v817 = vadd.f32 0.0, %v816
        %818 = vmatmul.f32.gmra.mxu0 %v409
        %v819 = vpop.f32.mrf.mxu0
        %v820 = vadd.f32 0.0, %v819
        %821 = vmatmul.f32.gmra.mxu0 %v412
        %v822 = vpop.f32.mrf.mxu0
        %v823 = vadd.f32 0.0, %v822
        %824 = vmatmul.f32.gmra.mxu0 %v415
        %v825 = vpop.f32.mrf.mxu0
        %v826 = vadd.f32 0.0, %v825
        %827 = vmatmul.f32.gmra.mxu0 %v418
        %v828 = vpop.f32.mrf.mxu0
        %v829 = vadd.f32 0.0, %v828
        %830 = vmatmul.f32.gmra.mxu0 %v421
        %v831 = vpop.f32.mrf.mxu0
        %v832 = vadd.f32 0.0, %v831
        %833 = vmatmul.f32.gmra.mxu0 %v424
        %v834 = vpop.f32.mrf.mxu0
        %v835 = vadd.f32 0.0, %v834
        %836 = vmatmul.f32.gmra.mxu0 %v427
        %v837 = vpop.f32.mrf.mxu0
        %v838 = vadd.f32 0.0, %v837
        %839 = vmatmul.f32.gmra.mxu0 %v430
        %v840 = vpop.f32.mrf.mxu0
        %v841 = vadd.f32 0.0, %v840
        %842 = vmatmul.f32.gmra.mxu0 %v433
        %v843 = vpop.f32.mrf.mxu0
        %v844 = vadd.f32 0.0, %v843
        %845 = vmatmul.f32.gmra.mxu0 %v436
        %v846 = vpop.f32.mrf.mxu0
        %v847 = vadd.f32 0.0, %v846
        %848 = vmatmul.f32.gmra.mxu0 %v439
        %v849 = vpop.f32.mrf.mxu0
        %v850 = vadd.f32 0.0, %v849
        %851 = vmatmul.f32.gmra.mxu0 %v442
        %v852 = vpop.f32.mrf.mxu0
        %v853 = vadd.f32 0.0, %v852
        %854 = vmatmul.f32.gmra.mxu0 %v445
        %v855 = vpop.f32.mrf.mxu0
        %v856 = vadd.f32 0.0, %v855
        %857 = vmatmul.f32.gmra.mxu0 %v448
        %v858 = vpop.f32.mrf.mxu0
        %v859 = vadd.f32 0.0, %v858
        %860 = vmatmul.f32.gmra.mxu0 %v451
        %v861 = vpop.f32.mrf.mxu0
        %v862 = vadd.f32 0.0, %v861
        %863 = vmatmul.f32.gmra.mxu0 %v454
        %v864 = vpop.f32.mrf.mxu0
        %v865 = vadd.f32 0.0, %v864
        %866 = vmatmul.f32.gmra.mxu0 %v457
        %v867 = vpop.f32.mrf.mxu0
        %v868 = vadd.f32 0.0, %v867
        %869 = vmatmul.f32.gmra.mxu0 %v460
        %v870 = vpop.f32.mrf.mxu0
        %v871 = vadd.f32 0.0, %v870
        %872 = vmatmul.f32.gmra.mxu0 %v463
        %v873 = vpop.f32.mrf.mxu0
        %v874 = vadd.f32 0.0, %v873
        %875 = vmatmul.f32.gmra.mxu0 %v466
        %v876 = vpop.f32.mrf.mxu0
        %v877 = vadd.f32 0.0, %v876
        %878 = vmatmul.f32.gmra.mxu0 %v469
        %v879 = vpop.f32.mrf.mxu0
        %v880 = vadd.f32 0.0, %v879
        %881 = vmatmul.f32.gmra.mxu0 %v472
        %v882 = vpop.f32.mrf.mxu0
        %v883 = vadd.f32 0.0, %v882
        %884 = vmatmul.f32.gmra.mxu0 %v475
        %v885 = vpop.f32.mrf.mxu0
        %v886 = vadd.f32 0.0, %v885
        %887 = vmatmul.f32.gmra.mxu0 %v478
        %v888 = vpop.f32.mrf.mxu0
        %v889 = vadd.f32 0.0, %v888
        %890 = vdwg.mxu0
        %891 = vmatpush.msra.mxu0 0.0
        %892 = vmatpush.msra.mxu0 0.0
        %893 = vmatpush.msra.mxu0 0.0
        %894 = vmatpush.msra.mxu0 0.0
        %895 = vmatpush.msra.mxu0 0.0
        %896 = vmatpush.msra.mxu0 0.0
        %897 = vmatpush.msra.mxu0 0.0
        %898 = vmatpush.msra.mxu0 0.0
        %899 = vmatpush.msra.mxu0 %v352
        %900 = vmatpush.msra.mxu0 %v342
        %901 = vmatpush.msra.mxu0 %v332
        %902 = vmatpush.msra.mxu0 %v322
        %903 = vmatpush.msra.mxu0 %v312
        %904 = vmatpush.msra.mxu0 %v302
        %905 = vmatpush.msra.mxu0 %v292
        %906 = vmatpush.msra.mxu0 %v282
        %907 = vmatmul.f32.gmra.mxu0 %v361
        %v908 = vpop.f32.mrf.mxu0
        %v909 = vadd.f32 0.0, %v908
        %910 = vmatmul.f32.gmra.mxu0 %v364
        %v911 = vpop.f32.mrf.mxu0
        %v912 = vadd.f32 0.0, %v911
        %913 = vmatmul.f32.gmra.mxu0 %v367
        %v914 = vpop.f32.mrf.mxu0
        %v915 = vadd.f32 0.0, %v914
        %916 = vmatmul.f32.gmra.mxu0 %v370
        %v917 = vpop.f32.mrf.mxu0
        %v918 = vadd.f32 0.0, %v917
        %919 = vmatmul.f32.gmra.mxu0 %v373
        %v920 = vpop.f32.mrf.mxu0
        %v921 = vadd.f32 0.0, %v920
        %922 = vmatmul.f32.gmra.mxu0 %v376
        %v923 = vpop.f32.mrf.mxu0
        %v924 = vadd.f32 0.0, %v923
        %925 = vmatmul.f32.gmra.mxu0 %v379
        %v926 = vpop.f32.mrf.mxu0
        %v927 = vadd.f32 0.0, %v926
        %928 = vmatmul.f32.gmra.mxu0 %v382
        %v929 = vpop.f32.mrf.mxu0
        %v930 = vadd.f32 0.0, %v929
        %931 = vmatmul.f32.gmra.mxu0 %v385
        %v932 = vpop.f32.mrf.mxu0
        %v933 = vadd.f32 0.0, %v932
        %934 = vmatmul.f32.gmra.mxu0 %v388
        %v935 = vpop.f32.mrf.mxu0
        %v936 = vadd.f32 0.0, %v935
        %937 = vmatmul.f32.gmra.mxu0 %v391
        %v938 = vpop.f32.mrf.mxu0
        %v939 = vadd.f32 0.0, %v938
        %940 = vmatmul.f32.gmra.mxu0 %v394
        %v941 = vpop.f32.mrf.mxu0
        %v942 = vadd.f32 0.0, %v941
        %943 = vmatmul.f32.gmra.mxu0 %v397
        %v944 = vpop.f32.mrf.mxu0
        %v945 = vadd.f32 0.0, %v944
        %946 = vmatmul.f32.gmra.mxu0 %v400
        %v947 = vpop.f32.mrf.mxu0
        %v948 = vadd.f32 0.0, %v947
        %949 = vmatmul.f32.gmra.mxu0 %v403
        %v950 = vpop.f32.mrf.mxu0
        %v951 = vadd.f32 0.0, %v950
        %952 = vmatmul.f32.gmra.mxu0 %v406
        %v953 = vpop.f32.mrf.mxu0
        %v954 = vadd.f32 0.0, %v953
        %955 = vmatmul.f32.gmra.mxu0 %v409
        %v956 = vpop.f32.mrf.mxu0
        %v957 = vadd.f32 0.0, %v956
        %958 = vmatmul.f32.gmra.mxu0 %v412
        %v959 = vpop.f32.mrf.mxu0
        %v960 = vadd.f32 0.0, %v959
        %961 = vmatmul.f32.gmra.mxu0 %v415
        %v962 = vpop.f32.mrf.mxu0
        %v963 = vadd.f32 0.0, %v962
        %964 = vmatmul.f32.gmra.mxu0 %v418
        %v965 = vpop.f32.mrf.mxu0
        %v966 = vadd.f32 0.0, %v965
        %967 = vmatmul.f32.gmra.mxu0 %v421
        %v968 = vpop.f32.mrf.mxu0
        %v969 = vadd.f32 0.0, %v968
        %970 = vmatmul.f32.gmra.mxu0 %v424
        %v971 = vpop.f32.mrf.mxu0
        %v972 = vadd.f32 0.0, %v971
        %973 = vmatmul.f32.gmra.mxu0 %v427
        %v974 = vpop.f32.mrf.mxu0
        %v975 = vadd.f32 0.0, %v974
        %976 = vmatmul.f32.gmra.mxu0 %v430
        %v977 = vpop.f32.mrf.mxu0
        %v978 = vadd.f32 0.0, %v977
        %979 = vmatmul.f32.gmra.mxu0 %v433
        %v980 = vpop.f32.mrf.mxu0
        %v981 = vadd.f32 0.0, %v980
        %982 = vmatmul.f32.gmra.mxu0 %v436
        %v983 = vpop.f32.mrf.mxu0
        %v984 = vadd.f32 0.0, %v983
        %985 = vmatmul.f32.gmra.mxu0 %v439
        %v986 = vpop.f32.mrf.mxu0
        %v987 = vadd.f32 0.0, %v986
        %988 = vmatmul.f32.gmra.mxu0 %v442
        %v989 = vpop.f32.mrf.mxu0
        %v990 = vadd.f32 0.0, %v989
        %991 = vmatmul.f32.gmra.mxu0 %v445
        %v992 = vpop.f32.mrf.mxu0
        %v993 = vadd.f32 0.0, %v992
        %994 = vmatmul.f32.gmra.mxu0 %v448
        %v995 = vpop.f32.mrf.mxu0
        %v996 = vadd.f32 0.0, %v995
        %997 = vmatmul.f32.gmra.mxu0 %v451
        %v998 = vpop.f32.mrf.mxu0
        %v999 = vadd.f32 0.0, %v998
        %1000 = vmatmul.f32.gmra.mxu0 %v454
        %v1001 = vpop.f32.mrf.mxu0
        %v1002 = vadd.f32 0.0, %v1001
        %1003 = vmatmul.f32.gmra.mxu0 %v457
        %v1004 = vpop.f32.mrf.mxu0
        %v1005 = vadd.f32 0.0, %v1004
        %1006 = vmatmul.f32.gmra.mxu0 %v460
        %v1007 = vpop.f32.mrf.mxu0
        %v1008 = vadd.f32 0.0, %v1007
        %1009 = vmatmul.f32.gmra.mxu0 %v463
        %v1010 = vpop.f32.mrf.mxu0
        %v1011 = vadd.f32 0.0, %v1010
        %1012 = vmatmul.f32.gmra.mxu0 %v466
        %v1013 = vpop.f32.mrf.mxu0
        %v1014 = vadd.f32 0.0, %v1013
        %1015 = vmatmul.f32.gmra.mxu0 %v469
        %v1016 = vpop.f32.mrf.mxu0
        %v1017 = vadd.f32 0.0, %v1016
        %1018 = vmatmul.f32.gmra.mxu0 %v472
        %v1019 = vpop.f32.mrf.mxu0
        %v1020 = vadd.f32 0.0, %v1019
        %1021 = vmatmul.f32.gmra.mxu0 %v475
        %v1022 = vpop.f32.mrf.mxu0
        %v1023 = vadd.f32 0.0, %v1022
        %1024 = vmatmul.f32.gmra.mxu0 %v478
        %v1025 = vpop.f32.mrf.mxu0
        %v1026 = vadd.f32 0.0, %v1025
        %1027 = vdwg.mxu0
        %1028 = vmatpush.msra.mxu0 0.0
        %1029 = vmatpush.msra.mxu0 0.0
        %1030 = vmatpush.msra.mxu0 0.0
        %1031 = vmatpush.msra.mxu0 0.0
        %1032 = vmatpush.msra.mxu0 0.0
        %1033 = vmatpush.msra.mxu0 0.0
        %1034 = vmatpush.msra.mxu0 0.0
        %1035 = vmatpush.msra.mxu0 0.0
        %1036 = vmatpush.msra.mxu0 %v353
        %1037 = vmatpush.msra.mxu0 %v343
        %1038 = vmatpush.msra.mxu0 %v333
        %1039 = vmatpush.msra.mxu0 %v323
        %1040 = vmatpush.msra.mxu0 %v313
        %1041 = vmatpush.msra.mxu0 %v303
        %1042 = vmatpush.msra.mxu0 %v293
        %1043 = vmatpush.msra.mxu0 %v283
        %1044 = vmatmul.f32.gmra.mxu0 %v361
        %v1045 = vpop.f32.mrf.mxu0
        %v1046 = vadd.f32 0.0, %v1045
        %1047 = vmatmul.f32.gmra.mxu0 %v364
        %v1048 = vpop.f32.mrf.mxu0
        %v1049 = vadd.f32 0.0, %v1048
        %1050 = vmatmul.f32.gmra.mxu0 %v367
        %v1051 = vpop.f32.mrf.mxu0
        %v1052 = vadd.f32 0.0, %v1051
        %1053 = vmatmul.f32.gmra.mxu0 %v370
        %v1054 = vpop.f32.mrf.mxu0
        %v1055 = vadd.f32 0.0, %v1054
        %1056 = vmatmul.f32.gmra.mxu0 %v373
        %v1057 = vpop.f32.mrf.mxu0
        %v1058 = vadd.f32 0.0, %v1057
        %1059 = vmatmul.f32.gmra.mxu0 %v376
        %v1060 = vpop.f32.mrf.mxu0
        %v1061 = vadd.f32 0.0, %v1060
        %1062 = vmatmul.f32.gmra.mxu0 %v379
        %v1063 = vpop.f32.mrf.mxu0
        %v1064 = vadd.f32 0.0, %v1063
        %1065 = vmatmul.f32.gmra.mxu0 %v382
        %v1066 = vpop.f32.mrf.mxu0
        %v1067 = vadd.f32 0.0, %v1066
        %1068 = vmatmul.f32.gmra.mxu0 %v385
        %v1069 = vpop.f32.mrf.mxu0
        %v1070 = vadd.f32 0.0, %v1069
        %1071 = vmatmul.f32.gmra.mxu0 %v388
        %v1072 = vpop.f32.mrf.mxu0
        %v1073 = vadd.f32 0.0, %v1072
        %1074 = vmatmul.f32.gmra.mxu0 %v391
        %v1075 = vpop.f32.mrf.mxu0
        %v1076 = vadd.f32 0.0, %v1075
        %1077 = vmatmul.f32.gmra.mxu0 %v394
        %v1078 = vpop.f32.mrf.mxu0
        %v1079 = vadd.f32 0.0, %v1078
        %1080 = vmatmul.f32.gmra.mxu0 %v397
        %v1081 = vpop.f32.mrf.mxu0
        %v1082 = vadd.f32 0.0, %v1081
        %1083 = vmatmul.f32.gmra.mxu0 %v400
        %v1084 = vpop.f32.mrf.mxu0
        %v1085 = vadd.f32 0.0, %v1084
        %1086 = vmatmul.f32.gmra.mxu0 %v403
        %v1087 = vpop.f32.mrf.mxu0
        %v1088 = vadd.f32 0.0, %v1087
        %1089 = vmatmul.f32.gmra.mxu0 %v406
        %v1090 = vpop.f32.mrf.mxu0
        %v1091 = vadd.f32 0.0, %v1090
        %1092 = vmatmul.f32.gmra.mxu0 %v409
        %v1093 = vpop.f32.mrf.mxu0
        %v1094 = vadd.f32 0.0, %v1093
        %1095 = vmatmul.f32.gmra.mxu0 %v412
        %v1096 = vpop.f32.mrf.mxu0
        %v1097 = vadd.f32 0.0, %v1096
        %1098 = vmatmul.f32.gmra.mxu0 %v415
        %v1099 = vpop.f32.mrf.mxu0
        %v1100 = vadd.f32 0.0, %v1099
        %1101 = vmatmul.f32.gmra.mxu0 %v418
        %v1102 = vpop.f32.mrf.mxu0
        %v1103 = vadd.f32 0.0, %v1102
        %1104 = vmatmul.f32.gmra.mxu0 %v421
        %v1105 = vpop.f32.mrf.mxu0
        %v1106 = vadd.f32 0.0, %v1105
        %1107 = vmatmul.f32.gmra.mxu0 %v424
        %v1108 = vpop.f32.mrf.mxu0
        %v1109 = vadd.f32 0.0, %v1108
        %1110 = vmatmul.f32.gmra.mxu0 %v427
        %v1111 = vpop.f32.mrf.mxu0
        %v1112 = vadd.f32 0.0, %v1111
        %1113 = vmatmul.f32.gmra.mxu0 %v430
        %v1114 = vpop.f32.mrf.mxu0
        %v1115 = vadd.f32 0.0, %v1114
        %1116 = vmatmul.f32.gmra.mxu0 %v433
        %v1117 = vpop.f32.mrf.mxu0
        %v1118 = vadd.f32 0.0, %v1117
        %1119 = vmatmul.f32.gmra.mxu0 %v436
        %v1120 = vpop.f32.mrf.mxu0
        %v1121 = vadd.f32 0.0, %v1120
        %1122 = vmatmul.f32.gmra.mxu0 %v439
        %v1123 = vpop.f32.mrf.mxu0
        %v1124 = vadd.f32 0.0, %v1123
        %1125 = vmatmul.f32.gmra.mxu0 %v442
        %v1126 = vpop.f32.mrf.mxu0
        %v1127 = vadd.f32 0.0, %v1126
        %1128 = vmatmul.f32.gmra.mxu0 %v445
        %v1129 = vpop.f32.mrf.mxu0
        %v1130 = vadd.f32 0.0, %v1129
        %1131 = vmatmul.f32.gmra.mxu0 %v448
        %v1132 = vpop.f32.mrf.mxu0
        %v1133 = vadd.f32 0.0, %v1132
        %1134 = vmatmul.f32.gmra.mxu0 %v451
        %v1135 = vpop.f32.mrf.mxu0
        %v1136 = vadd.f32 0.0, %v1135
        %1137 = vmatmul.f32.gmra.mxu0 %v454
        %v1138 = vpop.f32.mrf.mxu0
        %v1139 = vadd.f32 0.0, %v1138
        %1140 = vmatmul.f32.gmra.mxu0 %v457
        %v1141 = vpop.f32.mrf.mxu0
        %v1142 = vadd.f32 0.0, %v1141
        %1143 = vmatmul.f32.gmra.mxu0 %v460
        %v1144 = vpop.f32.mrf.mxu0
        %v1145 = vadd.f32 0.0, %v1144
        %1146 = vmatmul.f32.gmra.mxu0 %v463
        %v1147 = vpop.f32.mrf.mxu0
        %v1148 = vadd.f32 0.0, %v1147
        %1149 = vmatmul.f32.gmra.mxu0 %v466
        %v1150 = vpop.f32.mrf.mxu0
        %v1151 = vadd.f32 0.0, %v1150
        %1152 = vmatmul.f32.gmra.mxu0 %v469
        %v1153 = vpop.f32.mrf.mxu0
        %v1154 = vadd.f32 0.0, %v1153
        %1155 = vmatmul.f32.gmra.mxu0 %v472
        %v1156 = vpop.f32.mrf.mxu0
        %v1157 = vadd.f32 0.0, %v1156
        %1158 = vmatmul.f32.gmra.mxu0 %v475
        %v1159 = vpop.f32.mrf.mxu0
        %v1160 = vadd.f32 0.0, %v1159
        %1161 = vmatmul.f32.gmra.mxu0 %v478
        %v1162 = vpop.f32.mrf.mxu0
        %v1163 = vadd.f32 0.0, %v1162
        %1164 = vdwg.mxu0
        %1165 = vmatpush.msra.mxu0 0.0
        %1166 = vmatpush.msra.mxu0 0.0
        %1167 = vmatpush.msra.mxu0 0.0
        %1168 = vmatpush.msra.mxu0 0.0
        %1169 = vmatpush.msra.mxu0 0.0
        %1170 = vmatpush.msra.mxu0 0.0
        %1171 = vmatpush.msra.mxu0 0.0
        %1172 = vmatpush.msra.mxu0 0.0
        %1173 = vmatpush.msra.mxu0 %v354
        %1174 = vmatpush.msra.mxu0 %v344
        %1175 = vmatpush.msra.mxu0 %v334
        %1176 = vmatpush.msra.mxu0 %v324
        %1177 = vmatpush.msra.mxu0 %v314
        %1178 = vmatpush.msra.mxu0 %v304
        %1179 = vmatpush.msra.mxu0 %v294
        %1180 = vmatpush.msra.mxu0 %v284
        %1181 = vmatmul.f32.gmra.mxu0 %v361
        %v1182 = vpop.f32.mrf.mxu0
        %v1183 = vadd.f32 0.0, %v1182
        %1184 = vmatmul.f32.gmra.mxu0 %v364
        %v1185 = vpop.f32.mrf.mxu0
        %v1186 = vadd.f32 0.0, %v1185
        %1187 = vmatmul.f32.gmra.mxu0 %v367
        %v1188 = vpop.f32.mrf.mxu0
        %v1189 = vadd.f32 0.0, %v1188
        %1190 = vmatmul.f32.gmra.mxu0 %v370
        %v1191 = vpop.f32.mrf.mxu0
        %v1192 = vadd.f32 0.0, %v1191
        %1193 = vmatmul.f32.gmra.mxu0 %v373
        %v1194 = vpop.f32.mrf.mxu0
        %v1195 = vadd.f32 0.0, %v1194
        %1196 = vmatmul.f32.gmra.mxu0 %v376
        %v1197 = vpop.f32.mrf.mxu0
        %v1198 = vadd.f32 0.0, %v1197
        %1199 = vmatmul.f32.gmra.mxu0 %v379
        %v1200 = vpop.f32.mrf.mxu0
        %v1201 = vadd.f32 0.0, %v1200
        %1202 = vmatmul.f32.gmra.mxu0 %v382
        %v1203 = vpop.f32.mrf.mxu0
        %v1204 = vadd.f32 0.0, %v1203
        %1205 = vmatmul.f32.gmra.mxu0 %v385
        %v1206 = vpop.f32.mrf.mxu0
        %v1207 = vadd.f32 0.0, %v1206
        %1208 = vmatmul.f32.gmra.mxu0 %v388
        %v1209 = vpop.f32.mrf.mxu0
        %v1210 = vadd.f32 0.0, %v1209
        %1211 = vmatmul.f32.gmra.mxu0 %v391
        %v1212 = vpop.f32.mrf.mxu0
        %v1213 = vadd.f32 0.0, %v1212
        %1214 = vmatmul.f32.gmra.mxu0 %v394
        %v1215 = vpop.f32.mrf.mxu0
        %v1216 = vadd.f32 0.0, %v1215
        %1217 = vmatmul.f32.gmra.mxu0 %v397
        %v1218 = vpop.f32.mrf.mxu0
        %v1219 = vadd.f32 0.0, %v1218
        %1220 = vmatmul.f32.gmra.mxu0 %v400
        %v1221 = vpop.f32.mrf.mxu0
        %v1222 = vadd.f32 0.0, %v1221
        %1223 = vmatmul.f32.gmra.mxu0 %v403
        %v1224 = vpop.f32.mrf.mxu0
        %v1225 = vadd.f32 0.0, %v1224
        %1226 = vmatmul.f32.gmra.mxu0 %v406
        %v1227 = vpop.f32.mrf.mxu0
        %v1228 = vadd.f32 0.0, %v1227
        %1229 = vmatmul.f32.gmra.mxu0 %v409
        %v1230 = vpop.f32.mrf.mxu0
        %v1231 = vadd.f32 0.0, %v1230
        %1232 = vmatmul.f32.gmra.mxu0 %v412
        %v1233 = vpop.f32.mrf.mxu0
        %v1234 = vadd.f32 0.0, %v1233
        %1235 = vmatmul.f32.gmra.mxu0 %v415
        %v1236 = vpop.f32.mrf.mxu0
        %v1237 = vadd.f32 0.0, %v1236
        %1238 = vmatmul.f32.gmra.mxu0 %v418
        %v1239 = vpop.f32.mrf.mxu0
        %v1240 = vadd.f32 0.0, %v1239
        %1241 = vmatmul.f32.gmra.mxu0 %v421
        %v1242 = vpop.f32.mrf.mxu0
        %v1243 = vadd.f32 0.0, %v1242
        %1244 = vmatmul.f32.gmra.mxu0 %v424
        %v1245 = vpop.f32.mrf.mxu0
        %v1246 = vadd.f32 0.0, %v1245
        %1247 = vmatmul.f32.gmra.mxu0 %v427
        %v1248 = vpop.f32.mrf.mxu0
        %v1249 = vadd.f32 0.0, %v1248
        %1250 = vmatmul.f32.gmra.mxu0 %v430
        %v1251 = vpop.f32.mrf.mxu0
        %v1252 = vadd.f32 0.0, %v1251
        %1253 = vmatmul.f32.gmra.mxu0 %v433
        %v1254 = vpop.f32.mrf.mxu0
        %v1255 = vadd.f32 0.0, %v1254
        %1256 = vmatmul.f32.gmra.mxu0 %v436
        %v1257 = vpop.f32.mrf.mxu0
        %v1258 = vadd.f32 0.0, %v1257
        %1259 = vmatmul.f32.gmra.mxu0 %v439
        %v1260 = vpop.f32.mrf.mxu0
        %v1261 = vadd.f32 0.0, %v1260
        %1262 = vmatmul.f32.gmra.mxu0 %v442
        %v1263 = vpop.f32.mrf.mxu0
        %v1264 = vadd.f32 0.0, %v1263
        %1265 = vmatmul.f32.gmra.mxu0 %v445
        %v1266 = vpop.f32.mrf.mxu0
        %v1267 = vadd.f32 0.0, %v1266
        %1268 = vmatmul.f32.gmra.mxu0 %v448
        %v1269 = vpop.f32.mrf.mxu0
        %v1270 = vadd.f32 0.0, %v1269
        %1271 = vmatmul.f32.gmra.mxu0 %v451
        %v1272 = vpop.f32.mrf.mxu0
        %v1273 = vadd.f32 0.0, %v1272
        %1274 = vmatmul.f32.gmra.mxu0 %v454
        %v1275 = vpop.f32.mrf.mxu0
        %v1276 = vadd.f32 0.0, %v1275
        %1277 = vmatmul.f32.gmra.mxu0 %v457
        %v1278 = vpop.f32.mrf.mxu0
        %v1279 = vadd.f32 0.0, %v1278
        %1280 = vmatmul.f32.gmra.mxu0 %v460
        %v1281 = vpop.f32.mrf.mxu0
        %v1282 = vadd.f32 0.0, %v1281
        %1283 = vmatmul.f32.gmra.mxu0 %v463
        %v1284 = vpop.f32.mrf.mxu0
        %v1285 = vadd.f32 0.0, %v1284
        %1286 = vmatmul.f32.gmra.mxu0 %v466
        %v1287 = vpop.f32.mrf.mxu0
        %v1288 = vadd.f32 0.0, %v1287
        %1289 = vmatmul.f32.gmra.mxu0 %v469
        %v1290 = vpop.f32.mrf.mxu0
        %v1291 = vadd.f32 0.0, %v1290
        %1292 = vmatmul.f32.gmra.mxu0 %v472
        %v1293 = vpop.f32.mrf.mxu0
        %v1294 = vadd.f32 0.0, %v1293
        %1295 = vmatmul.f32.gmra.mxu0 %v475
        %v1296 = vpop.f32.mrf.mxu0
        %v1297 = vadd.f32 0.0, %v1296
        %1298 = vmatmul.f32.gmra.mxu0 %v478
        %v1299 = vpop.f32.mrf.mxu0
        %v1300 = vadd.f32 0.0, %v1299
        %1301 = vdwg.mxu0
        %1302 = vmatpush.msra.mxu0 0.0
        %1303 = vmatpush.msra.mxu0 0.0
        %1304 = vmatpush.msra.mxu0 0.0
        %1305 = vmatpush.msra.mxu0 0.0
        %1306 = vmatpush.msra.mxu0 0.0
        %1307 = vmatpush.msra.mxu0 0.0
        %1308 = vmatpush.msra.mxu0 0.0
        %1309 = vmatpush.msra.mxu0 0.0
        %1310 = vmatpush.msra.mxu0 %v355
        %1311 = vmatpush.msra.mxu0 %v345
        %1312 = vmatpush.msra.mxu0 %v335
        %1313 = vmatpush.msra.mxu0 %v325
        %1314 = vmatpush.msra.mxu0 %v315
        %1315 = vmatpush.msra.mxu0 %v305
        %1316 = vmatpush.msra.mxu0 %v295
        %1317 = vmatpush.msra.mxu0 %v285
        %1318 = vmatmul.f32.gmra.mxu0 %v361
        %v1319 = vpop.f32.mrf.mxu0
        %v1320 = vadd.f32 0.0, %v1319
        %1321 = vmatmul.f32.gmra.mxu0 %v364
        %v1322 = vpop.f32.mrf.mxu0
        %v1323 = vadd.f32 0.0, %v1322
        %1324 = vmatmul.f32.gmra.mxu0 %v367
        %v1325 = vpop.f32.mrf.mxu0
        %v1326 = vadd.f32 0.0, %v1325
        %1327 = vmatmul.f32.gmra.mxu0 %v370
        %v1328 = vpop.f32.mrf.mxu0
        %v1329 = vadd.f32 0.0, %v1328
        %1330 = vmatmul.f32.gmra.mxu0 %v373
        %v1331 = vpop.f32.mrf.mxu0
        %v1332 = vadd.f32 0.0, %v1331
        %1333 = vmatmul.f32.gmra.mxu0 %v376
        %v1334 = vpop.f32.mrf.mxu0
        %v1335 = vadd.f32 0.0, %v1334
        %1336 = vmatmul.f32.gmra.mxu0 %v379
        %v1337 = vpop.f32.mrf.mxu0
        %v1338 = vadd.f32 0.0, %v1337
        %1339 = vmatmul.f32.gmra.mxu0 %v382
        %v1340 = vpop.f32.mrf.mxu0
        %v1341 = vadd.f32 0.0, %v1340
        %1342 = vmatmul.f32.gmra.mxu0 %v385
        %v1343 = vpop.f32.mrf.mxu0
        %v1344 = vadd.f32 0.0, %v1343
        %1345 = vmatmul.f32.gmra.mxu0 %v388
        %v1346 = vpop.f32.mrf.mxu0
        %v1347 = vadd.f32 0.0, %v1346
        %1348 = vmatmul.f32.gmra.mxu0 %v391
        %v1349 = vpop.f32.mrf.mxu0
        %v1350 = vadd.f32 0.0, %v1349
        %1351 = vmatmul.f32.gmra.mxu0 %v394
        %v1352 = vpop.f32.mrf.mxu0
        %v1353 = vadd.f32 0.0, %v1352
        %1354 = vmatmul.f32.gmra.mxu0 %v397
        %v1355 = vpop.f32.mrf.mxu0
        %v1356 = vadd.f32 0.0, %v1355
        %1357 = vmatmul.f32.gmra.mxu0 %v400
        %v1358 = vpop.f32.mrf.mxu0
        %v1359 = vadd.f32 0.0, %v1358
        %1360 = vmatmul.f32.gmra.mxu0 %v403
        %v1361 = vpop.f32.mrf.mxu0
        %v1362 = vadd.f32 0.0, %v1361
        %1363 = vmatmul.f32.gmra.mxu0 %v406
        %v1364 = vpop.f32.mrf.mxu0
        %v1365 = vadd.f32 0.0, %v1364
        %1366 = vmatmul.f32.gmra.mxu0 %v409
        %v1367 = vpop.f32.mrf.mxu0
        %v1368 = vadd.f32 0.0, %v1367
        %1369 = vmatmul.f32.gmra.mxu0 %v412
        %v1370 = vpop.f32.mrf.mxu0
        %v1371 = vadd.f32 0.0, %v1370
        %1372 = vmatmul.f32.gmra.mxu0 %v415
        %v1373 = vpop.f32.mrf.mxu0
        %v1374 = vadd.f32 0.0, %v1373
        %1375 = vmatmul.f32.gmra.mxu0 %v418
        %v1376 = vpop.f32.mrf.mxu0
        %v1377 = vadd.f32 0.0, %v1376
        %1378 = vmatmul.f32.gmra.mxu0 %v421
        %v1379 = vpop.f32.mrf.mxu0
        %v1380 = vadd.f32 0.0, %v1379
        %1381 = vmatmul.f32.gmra.mxu0 %v424
        %v1382 = vpop.f32.mrf.mxu0
        %v1383 = vadd.f32 0.0, %v1382
        %1384 = vmatmul.f32.gmra.mxu0 %v427
        %v1385 = vpop.f32.mrf.mxu0
        %v1386 = vadd.f32 0.0, %v1385
        %1387 = vmatmul.f32.gmra.mxu0 %v430
        %v1388 = vpop.f32.mrf.mxu0
        %v1389 = vadd.f32 0.0, %v1388
        %1390 = vmatmul.f32.gmra.mxu0 %v433
        %v1391 = vpop.f32.mrf.mxu0
        %v1392 = vadd.f32 0.0, %v1391
        %1393 = vmatmul.f32.gmra.mxu0 %v436
        %v1394 = vpop.f32.mrf.mxu0
        %v1395 = vadd.f32 0.0, %v1394
        %1396 = vmatmul.f32.gmra.mxu0 %v439
        %v1397 = vpop.f32.mrf.mxu0
        %v1398 = vadd.f32 0.0, %v1397
        %1399 = vmatmul.f32.gmra.mxu0 %v442
        %v1400 = vpop.f32.mrf.mxu0
        %v1401 = vadd.f32 0.0, %v1400
        %1402 = vmatmul.f32.gmra.mxu0 %v445
        %v1403 = vpop.f32.mrf.mxu0
        %v1404 = vadd.f32 0.0, %v1403
        %1405 = vmatmul.f32.gmra.mxu0 %v448
        %v1406 = vpop.f32.mrf.mxu0
        %v1407 = vadd.f32 0.0, %v1406
        %1408 = vmatmul.f32.gmra.mxu0 %v451
        %v1409 = vpop.f32.mrf.mxu0
        %v1410 = vadd.f32 0.0, %v1409
        %1411 = vmatmul.f32.gmra.mxu0 %v454
        %v1412 = vpop.f32.mrf.mxu0
        %v1413 = vadd.f32 0.0, %v1412
        %1414 = vmatmul.f32.gmra.mxu0 %v457
        %v1415 = vpop.f32.mrf.mxu0
        %v1416 = vadd.f32 0.0, %v1415
        %1417 = vmatmul.f32.gmra.mxu0 %v460
        %v1418 = vpop.f32.mrf.mxu0
        %v1419 = vadd.f32 0.0, %v1418
        %1420 = vmatmul.f32.gmra.mxu0 %v463
        %v1421 = vpop.f32.mrf.mxu0
        %v1422 = vadd.f32 0.0, %v1421
        %1423 = vmatmul.f32.gmra.mxu0 %v466
        %v1424 = vpop.f32.mrf.mxu0
        %v1425 = vadd.f32 0.0, %v1424
        %1426 = vmatmul.f32.gmra.mxu0 %v469
        %v1427 = vpop.f32.mrf.mxu0
        %v1428 = vadd.f32 0.0, %v1427
        %1429 = vmatmul.f32.gmra.mxu0 %v472
        %v1430 = vpop.f32.mrf.mxu0
        %v1431 = vadd.f32 0.0, %v1430
        %1432 = vmatmul.f32.gmra.mxu0 %v475
        %v1433 = vpop.f32.mrf.mxu0
        %v1434 = vadd.f32 0.0, %v1433
        %1435 = vmatmul.f32.gmra.mxu0 %v478
        %v1436 = vpop.f32.mrf.mxu0
        %v1437 = vadd.f32 0.0, %v1436
        %1438 = vdwg.mxu0
        %1439 = vmatpush.msra.mxu0 0.0
        %1440 = vmatpush.msra.mxu0 0.0
        %1441 = vmatpush.msra.mxu0 0.0
        %1442 = vmatpush.msra.mxu0 0.0
        %1443 = vmatpush.msra.mxu0 0.0
        %1444 = vmatpush.msra.mxu0 0.0
        %1445 = vmatpush.msra.mxu0 0.0
        %1446 = vmatpush.msra.mxu0 0.0
        %1447 = vmatpush.msra.mxu0 %v356
        %1448 = vmatpush.msra.mxu0 %v346
        %1449 = vmatpush.msra.mxu0 %v336
        %1450 = vmatpush.msra.mxu0 %v326
        %1451 = vmatpush.msra.mxu0 %v316
        %1452 = vmatpush.msra.mxu0 %v306
        %1453 = vmatpush.msra.mxu0 %v296
        %1454 = vmatpush.msra.mxu0 %v286
        %1455 = vmatmul.f32.gmra.mxu0 %v361
        %v1456 = vpop.f32.mrf.mxu0
        %v1457 = vadd.f32 0.0, %v1456
        %1458 = vmatmul.f32.gmra.mxu0 %v364
        %v1459 = vpop.f32.mrf.mxu0
        %v1460 = vadd.f32 0.0, %v1459
        %1461 = vmatmul.f32.gmra.mxu0 %v367
        %v1462 = vpop.f32.mrf.mxu0
        %v1463 = vadd.f32 0.0, %v1462
        %1464 = vmatmul.f32.gmra.mxu0 %v370
        %v1465 = vpop.f32.mrf.mxu0
        %v1466 = vadd.f32 0.0, %v1465
        %1467 = vmatmul.f32.gmra.mxu0 %v373
        %v1468 = vpop.f32.mrf.mxu0
        %v1469 = vadd.f32 0.0, %v1468
        %1470 = vmatmul.f32.gmra.mxu0 %v376
        %v1471 = vpop.f32.mrf.mxu0
        %v1472 = vadd.f32 0.0, %v1471
        %1473 = vmatmul.f32.gmra.mxu0 %v379
        %v1474 = vpop.f32.mrf.mxu0
        %v1475 = vadd.f32 0.0, %v1474
        %1476 = vmatmul.f32.gmra.mxu0 %v382
        %v1477 = vpop.f32.mrf.mxu0
        %v1478 = vadd.f32 0.0, %v1477
        %1479 = vmatmul.f32.gmra.mxu0 %v385
        %v1480 = vpop.f32.mrf.mxu0
        %v1481 = vadd.f32 0.0, %v1480
        %1482 = vmatmul.f32.gmra.mxu0 %v388
        %v1483 = vpop.f32.mrf.mxu0
        %v1484 = vadd.f32 0.0, %v1483
        %1485 = vmatmul.f32.gmra.mxu0 %v391
        %v1486 = vpop.f32.mrf.mxu0
        %v1487 = vadd.f32 0.0, %v1486
        %1488 = vmatmul.f32.gmra.mxu0 %v394
        %v1489 = vpop.f32.mrf.mxu0
        %v1490 = vadd.f32 0.0, %v1489
        %1491 = vmatmul.f32.gmra.mxu0 %v397
        %v1492 = vpop.f32.mrf.mxu0
        %v1493 = vadd.f32 0.0, %v1492
        %1494 = vmatmul.f32.gmra.mxu0 %v400
        %v1495 = vpop.f32.mrf.mxu0
        %v1496 = vadd.f32 0.0, %v1495
        %1497 = vmatmul.f32.gmra.mxu0 %v403
        %v1498 = vpop.f32.mrf.mxu0
        %v1499 = vadd.f32 0.0, %v1498
        %1500 = vmatmul.f32.gmra.mxu0 %v406
        %v1501 = vpop.f32.mrf.mxu0
        %v1502 = vadd.f32 0.0, %v1501
        %1503 = vmatmul.f32.gmra.mxu0 %v409
        %v1504 = vpop.f32.mrf.mxu0
        %v1505 = vadd.f32 0.0, %v1504
        %1506 = vmatmul.f32.gmra.mxu0 %v412
        %v1507 = vpop.f32.mrf.mxu0
        %v1508 = vadd.f32 0.0, %v1507
        %1509 = vmatmul.f32.gmra.mxu0 %v415
        %v1510 = vpop.f32.mrf.mxu0
        %v1511 = vadd.f32 0.0, %v1510
        %1512 = vmatmul.f32.gmra.mxu0 %v418
        %v1513 = vpop.f32.mrf.mxu0
        %v1514 = vadd.f32 0.0, %v1513
        %1515 = vmatmul.f32.gmra.mxu0 %v421
        %v1516 = vpop.f32.mrf.mxu0
        %v1517 = vadd.f32 0.0, %v1516
        %1518 = vmatmul.f32.gmra.mxu0 %v424
        %v1519 = vpop.f32.mrf.mxu0
        %v1520 = vadd.f32 0.0, %v1519
        %1521 = vmatmul.f32.gmra.mxu0 %v427
        %v1522 = vpop.f32.mrf.mxu0
        %v1523 = vadd.f32 0.0, %v1522
        %1524 = vmatmul.f32.gmra.mxu0 %v430
        %v1525 = vpop.f32.mrf.mxu0
        %v1526 = vadd.f32 0.0, %v1525
        %1527 = vmatmul.f32.gmra.mxu0 %v433
        %v1528 = vpop.f32.mrf.mxu0
        %v1529 = vadd.f32 0.0, %v1528
        %1530 = vmatmul.f32.gmra.mxu0 %v436
        %v1531 = vpop.f32.mrf.mxu0
        %v1532 = vadd.f32 0.0, %v1531
        %1533 = vmatmul.f32.gmra.mxu0 %v439
        %v1534 = vpop.f32.mrf.mxu0
        %v1535 = vadd.f32 0.0, %v1534
        %1536 = vmatmul.f32.gmra.mxu0 %v442
        %v1537 = vpop.f32.mrf.mxu0
        %v1538 = vadd.f32 0.0, %v1537
        %1539 = vmatmul.f32.gmra.mxu0 %v445
        %v1540 = vpop.f32.mrf.mxu0
        %v1541 = vadd.f32 0.0, %v1540
        %1542 = vmatmul.f32.gmra.mxu0 %v448
        %v1543 = vpop.f32.mrf.mxu0
        %v1544 = vadd.f32 0.0, %v1543
        %1545 = vmatmul.f32.gmra.mxu0 %v451
        %v1546 = vpop.f32.mrf.mxu0
        %v1547 = vadd.f32 0.0, %v1546
        %1548 = vmatmul.f32.gmra.mxu0 %v454
        %v1549 = vpop.f32.mrf.mxu0
        %v1550 = vadd.f32 0.0, %v1549
        %1551 = vmatmul.f32.gmra.mxu0 %v457
        %v1552 = vpop.f32.mrf.mxu0
        %v1553 = vadd.f32 0.0, %v1552
        %1554 = vmatmul.f32.gmra.mxu0 %v460
        %v1555 = vpop.f32.mrf.mxu0
        %v1556 = vadd.f32 0.0, %v1555
        %1557 = vmatmul.f32.gmra.mxu0 %v463
        %v1558 = vpop.f32.mrf.mxu0
        %v1559 = vadd.f32 0.0, %v1558
        %1560 = vmatmul.f32.gmra.mxu0 %v466
        %v1561 = vpop.f32.mrf.mxu0
        %v1562 = vadd.f32 0.0, %v1561
        %1563 = vmatmul.f32.gmra.mxu0 %v469
        %v1564 = vpop.f32.mrf.mxu0
        %v1565 = vadd.f32 0.0, %v1564
        %1566 = vmatmul.f32.gmra.mxu0 %v472
        %v1567 = vpop.f32.mrf.mxu0
        %v1568 = vadd.f32 0.0, %v1567
        %1569 = vmatmul.f32.gmra.mxu0 %v475
        %v1570 = vpop.f32.mrf.mxu0
        %v1571 = vadd.f32 0.0, %v1570
        %1572 = vmatmul.f32.gmra.mxu0 %v478
        %v1573 = vpop.f32.mrf.mxu0
        %v1574 = vadd.f32 0.0, %v1573
        %1575 = vdwg.mxu0
        %1576 = vmatpush.msra.mxu0 0.0
        %1577 = vmatpush.msra.mxu0 0.0
        %1578 = vmatpush.msra.mxu0 0.0
        %1579 = vmatpush.msra.mxu0 0.0
        %1580 = vmatpush.msra.mxu0 0.0
        %1581 = vmatpush.msra.mxu0 0.0
        %1582 = vmatpush.msra.mxu0 0.0
        %1583 = vmatpush.msra.mxu0 0.0
        %1584 = vmatpush.msra.mxu0 %v357
        %1585 = vmatpush.msra.mxu0 %v347
        %1586 = vmatpush.msra.mxu0 %v337
        %1587 = vmatpush.msra.mxu0 %v327
        %1588 = vmatpush.msra.mxu0 %v317
        %1589 = vmatpush.msra.mxu0 %v307
        %1590 = vmatpush.msra.mxu0 %v297
        %1591 = vmatpush.msra.mxu0 %v287
        %1592 = vmatmul.f32.gmra.mxu0 %v361
        %v1593 = vpop.f32.mrf.mxu0
        %v1594 = vadd.f32 0.0, %v1593
        %1595 = vmatmul.f32.gmra.mxu0 %v364
        %v1596 = vpop.f32.mrf.mxu0
        %v1597 = vadd.f32 0.0, %v1596
        %1598 = vmatmul.f32.gmra.mxu0 %v367
        %v1599 = vpop.f32.mrf.mxu0
        %v1600 = vadd.f32 0.0, %v1599
        %1601 = vmatmul.f32.gmra.mxu0 %v370
        %v1602 = vpop.f32.mrf.mxu0
        %v1603 = vadd.f32 0.0, %v1602
        %1604 = vmatmul.f32.gmra.mxu0 %v373
        %v1605 = vpop.f32.mrf.mxu0
        %v1606 = vadd.f32 0.0, %v1605
        %1607 = vmatmul.f32.gmra.mxu0 %v376
        %v1608 = vpop.f32.mrf.mxu0
        %v1609 = vadd.f32 0.0, %v1608
        %1610 = vmatmul.f32.gmra.mxu0 %v379
        %v1611 = vpop.f32.mrf.mxu0
        %v1612 = vadd.f32 0.0, %v1611
        %1613 = vmatmul.f32.gmra.mxu0 %v382
        %v1614 = vpop.f32.mrf.mxu0
        %v1615 = vadd.f32 0.0, %v1614
        %1616 = vmatmul.f32.gmra.mxu0 %v385
        %v1617 = vpop.f32.mrf.mxu0
        %v1618 = vadd.f32 0.0, %v1617
        %1619 = vmatmul.f32.gmra.mxu0 %v388
        %v1620 = vpop.f32.mrf.mxu0
        %v1621 = vadd.f32 0.0, %v1620
        %1622 = vmatmul.f32.gmra.mxu0 %v391
        %v1623 = vpop.f32.mrf.mxu0
        %v1624 = vadd.f32 0.0, %v1623
        %1625 = vmatmul.f32.gmra.mxu0 %v394
        %v1626 = vpop.f32.mrf.mxu0
        %v1627 = vadd.f32 0.0, %v1626
        %1628 = vmatmul.f32.gmra.mxu0 %v397
        %v1629 = vpop.f32.mrf.mxu0
        %v1630 = vadd.f32 0.0, %v1629
        %1631 = vmatmul.f32.gmra.mxu0 %v400
        %v1632 = vpop.f32.mrf.mxu0
        %v1633 = vadd.f32 0.0, %v1632
        %1634 = vmatmul.f32.gmra.mxu0 %v403
        %v1635 = vpop.f32.mrf.mxu0
        %v1636 = vadd.f32 0.0, %v1635
        %1637 = vmatmul.f32.gmra.mxu0 %v406
        %v1638 = vpop.f32.mrf.mxu0
        %v1639 = vadd.f32 0.0, %v1638
        %1640 = vmatmul.f32.gmra.mxu0 %v409
        %v1641 = vpop.f32.mrf.mxu0
        %v1642 = vadd.f32 0.0, %v1641
        %1643 = vmatmul.f32.gmra.mxu0 %v412
        %v1644 = vpop.f32.mrf.mxu0
        %v1645 = vadd.f32 0.0, %v1644
        %1646 = vmatmul.f32.gmra.mxu0 %v415
        %v1647 = vpop.f32.mrf.mxu0
        %v1648 = vadd.f32 0.0, %v1647
        %1649 = vmatmul.f32.gmra.mxu0 %v418
        %v1650 = vpop.f32.mrf.mxu0
        %v1651 = vadd.f32 0.0, %v1650
        %1652 = vmatmul.f32.gmra.mxu0 %v421
        %v1653 = vpop.f32.mrf.mxu0
        %v1654 = vadd.f32 0.0, %v1653
        %1655 = vmatmul.f32.gmra.mxu0 %v424
        %v1656 = vpop.f32.mrf.mxu0
        %v1657 = vadd.f32 0.0, %v1656
        %1658 = vmatmul.f32.gmra.mxu0 %v427
        %v1659 = vpop.f32.mrf.mxu0
        %v1660 = vadd.f32 0.0, %v1659
        %1661 = vmatmul.f32.gmra.mxu0 %v430
        %v1662 = vpop.f32.mrf.mxu0
        %v1663 = vadd.f32 0.0, %v1662
        %1664 = vmatmul.f32.gmra.mxu0 %v433
        %v1665 = vpop.f32.mrf.mxu0
        %v1666 = vadd.f32 0.0, %v1665
        %1667 = vmatmul.f32.gmra.mxu0 %v436
        %v1668 = vpop.f32.mrf.mxu0
        %v1669 = vadd.f32 0.0, %v1668
        %1670 = vmatmul.f32.gmra.mxu0 %v439
        %v1671 = vpop.f32.mrf.mxu0
        %v1672 = vadd.f32 0.0, %v1671
        %1673 = vmatmul.f32.gmra.mxu0 %v442
        %v1674 = vpop.f32.mrf.mxu0
        %v1675 = vadd.f32 0.0, %v1674
        %1676 = vmatmul.f32.gmra.mxu0 %v445
        %v1677 = vpop.f32.mrf.mxu0
        %v1678 = vadd.f32 0.0, %v1677
        %1679 = vmatmul.f32.gmra.mxu0 %v448
        %v1680 = vpop.f32.mrf.mxu0
        %v1681 = vadd.f32 0.0, %v1680
        %1682 = vmatmul.f32.gmra.mxu0 %v451
        %v1683 = vpop.f32.mrf.mxu0
        %v1684 = vadd.f32 0.0, %v1683
        %1685 = vmatmul.f32.gmra.mxu0 %v454
        %v1686 = vpop.f32.mrf.mxu0
        %v1687 = vadd.f32 0.0, %v1686
        %1688 = vmatmul.f32.gmra.mxu0 %v457
        %v1689 = vpop.f32.mrf.mxu0
        %v1690 = vadd.f32 0.0, %v1689
        %1691 = vmatmul.f32.gmra.mxu0 %v460
        %v1692 = vpop.f32.mrf.mxu0
        %v1693 = vadd.f32 0.0, %v1692
        %1694 = vmatmul.f32.gmra.mxu0 %v463
        %v1695 = vpop.f32.mrf.mxu0
        %v1696 = vadd.f32 0.0, %v1695
        %1697 = vmatmul.f32.gmra.mxu0 %v466
        %v1698 = vpop.f32.mrf.mxu0
        %v1699 = vadd.f32 0.0, %v1698
        %1700 = vmatmul.f32.gmra.mxu0 %v469
        %v1701 = vpop.f32.mrf.mxu0
        %v1702 = vadd.f32 0.0, %v1701
        %1703 = vmatmul.f32.gmra.mxu0 %v472
        %v1704 = vpop.f32.mrf.mxu0
        %v1705 = vadd.f32 0.0, %v1704
        %1706 = vmatmul.f32.gmra.mxu0 %v475
        %v1707 = vpop.f32.mrf.mxu0
        %v1708 = vadd.f32 0.0, %v1707
        %1709 = vmatmul.f32.gmra.mxu0 %v478
        %v1710 = vpop.f32.mrf.mxu0
        %v1711 = vadd.f32 0.0, %v1710
        %1712 = vdwg.mxu0
        %1713 = vmatpush.msra.mxu0 0.0
        %1714 = vmatpush.msra.mxu0 0.0
        %1715 = vmatpush.msra.mxu0 0.0
        %1716 = vmatpush.msra.mxu0 0.0
        %1717 = vmatpush.msra.mxu0 0.0
        %1718 = vmatpush.msra.mxu0 0.0
        %1719 = vmatpush.msra.mxu0 0.0
        %1720 = vmatpush.msra.mxu0 0.0
        %1721 = vmatpush.msra.mxu0 %v358
        %1722 = vmatpush.msra.mxu0 %v348
        %1723 = vmatpush.msra.mxu0 %v338
        %1724 = vmatpush.msra.mxu0 %v328
        %1725 = vmatpush.msra.mxu0 %v318
        %1726 = vmatpush.msra.mxu0 %v308
        %1727 = vmatpush.msra.mxu0 %v298
        %1728 = vmatpush.msra.mxu0 %v288
        %1729 = vmatmul.f32.gmra.mxu0 %v361
        %v1730 = vpop.f32.mrf.mxu0
        %v1731 = vadd.f32 0.0, %v1730
        %1732 = vmatmul.f32.gmra.mxu0 %v364
        %v1733 = vpop.f32.mrf.mxu0
        %v1734 = vadd.f32 0.0, %v1733
        %1735 = vmatmul.f32.gmra.mxu0 %v367
        %v1736 = vpop.f32.mrf.mxu0
        %v1737 = vadd.f32 0.0, %v1736
        %1738 = vmatmul.f32.gmra.mxu0 %v370
        %v1739 = vpop.f32.mrf.mxu0
        %v1740 = vadd.f32 0.0, %v1739
        %1741 = vmatmul.f32.gmra.mxu0 %v373
        %v1742 = vpop.f32.mrf.mxu0
        %v1743 = vadd.f32 0.0, %v1742
        %1744 = vmatmul.f32.gmra.mxu0 %v376
        %v1745 = vpop.f32.mrf.mxu0
        %v1746 = vadd.f32 0.0, %v1745
        %1747 = vmatmul.f32.gmra.mxu0 %v379
        %v1748 = vpop.f32.mrf.mxu0
        %v1749 = vadd.f32 0.0, %v1748
        %1750 = vmatmul.f32.gmra.mxu0 %v382
        %v1751 = vpop.f32.mrf.mxu0
        %v1752 = vadd.f32 0.0, %v1751
        %1753 = vmatmul.f32.gmra.mxu0 %v385
        %v1754 = vpop.f32.mrf.mxu0
        %v1755 = vadd.f32 0.0, %v1754
        %1756 = vmatmul.f32.gmra.mxu0 %v388
        %v1757 = vpop.f32.mrf.mxu0
        %v1758 = vadd.f32 0.0, %v1757
        %1759 = vmatmul.f32.gmra.mxu0 %v391
        %v1760 = vpop.f32.mrf.mxu0
        %v1761 = vadd.f32 0.0, %v1760
        %1762 = vmatmul.f32.gmra.mxu0 %v394
        %v1763 = vpop.f32.mrf.mxu0
        %v1764 = vadd.f32 0.0, %v1763
        %1765 = vmatmul.f32.gmra.mxu0 %v397
        %v1766 = vpop.f32.mrf.mxu0
        %v1767 = vadd.f32 0.0, %v1766
        %1768 = vmatmul.f32.gmra.mxu0 %v400
        %v1769 = vpop.f32.mrf.mxu0
        %v1770 = vadd.f32 0.0, %v1769
        %1771 = vmatmul.f32.gmra.mxu0 %v403
        %v1772 = vpop.f32.mrf.mxu0
        %v1773 = vadd.f32 0.0, %v1772
        %1774 = vmatmul.f32.gmra.mxu0 %v406
        %v1775 = vpop.f32.mrf.mxu0
        %v1776 = vadd.f32 0.0, %v1775
        %1777 = vmatmul.f32.gmra.mxu0 %v409
        %v1778 = vpop.f32.mrf.mxu0
        %v1779 = vadd.f32 0.0, %v1778
        %1780 = vmatmul.f32.gmra.mxu0 %v412
        %v1781 = vpop.f32.mrf.mxu0
        %v1782 = vadd.f32 0.0, %v1781
        %1783 = vmatmul.f32.gmra.mxu0 %v415
        %v1784 = vpop.f32.mrf.mxu0
        %v1785 = vadd.f32 0.0, %v1784
        %1786 = vmatmul.f32.gmra.mxu0 %v418
        %v1787 = vpop.f32.mrf.mxu0
        %v1788 = vadd.f32 0.0, %v1787
        %1789 = vmatmul.f32.gmra.mxu0 %v421
        %v1790 = vpop.f32.mrf.mxu0
        %v1791 = vadd.f32 0.0, %v1790
        %1792 = vmatmul.f32.gmra.mxu0 %v424
        %v1793 = vpop.f32.mrf.mxu0
        %v1794 = vadd.f32 0.0, %v1793
        %1795 = vmatmul.f32.gmra.mxu0 %v427
        %v1796 = vpop.f32.mrf.mxu0
        %v1797 = vadd.f32 0.0, %v1796
        %1798 = vmatmul.f32.gmra.mxu0 %v430
        %v1799 = vpop.f32.mrf.mxu0
        %v1800 = vadd.f32 0.0, %v1799
        %1801 = vmatmul.f32.gmra.mxu0 %v433
        %v1802 = vpop.f32.mrf.mxu0
        %v1803 = vadd.f32 0.0, %v1802
        %1804 = vmatmul.f32.gmra.mxu0 %v436
        %v1805 = vpop.f32.mrf.mxu0
        %v1806 = vadd.f32 0.0, %v1805
        %1807 = vmatmul.f32.gmra.mxu0 %v439
        %v1808 = vpop.f32.mrf.mxu0
        %v1809 = vadd.f32 0.0, %v1808
        %1810 = vmatmul.f32.gmra.mxu0 %v442
        %v1811 = vpop.f32.mrf.mxu0
        %v1812 = vadd.f32 0.0, %v1811
        %1813 = vmatmul.f32.gmra.mxu0 %v445
        %v1814 = vpop.f32.mrf.mxu0
        %v1815 = vadd.f32 0.0, %v1814
        %1816 = vmatmul.f32.gmra.mxu0 %v448
        %v1817 = vpop.f32.mrf.mxu0
        %v1818 = vadd.f32 0.0, %v1817
        %1819 = vmatmul.f32.gmra.mxu0 %v451
        %v1820 = vpop.f32.mrf.mxu0
        %v1821 = vadd.f32 0.0, %v1820
        %1822 = vmatmul.f32.gmra.mxu0 %v454
        %v1823 = vpop.f32.mrf.mxu0
        %v1824 = vadd.f32 0.0, %v1823
        %1825 = vmatmul.f32.gmra.mxu0 %v457
        %v1826 = vpop.f32.mrf.mxu0
        %v1827 = vadd.f32 0.0, %v1826
        %1828 = vmatmul.f32.gmra.mxu0 %v460
        %v1829 = vpop.f32.mrf.mxu0
        %v1830 = vadd.f32 0.0, %v1829
        %1831 = vmatmul.f32.gmra.mxu0 %v463
        %v1832 = vpop.f32.mrf.mxu0
        %v1833 = vadd.f32 0.0, %v1832
        %1834 = vmatmul.f32.gmra.mxu0 %v466
        %v1835 = vpop.f32.mrf.mxu0
        %v1836 = vadd.f32 0.0, %v1835
        %1837 = vmatmul.f32.gmra.mxu0 %v469
        %v1838 = vpop.f32.mrf.mxu0
        %v1839 = vadd.f32 0.0, %v1838
        %1840 = vmatmul.f32.gmra.mxu0 %v472
        %v1841 = vpop.f32.mrf.mxu0
        %v1842 = vadd.f32 0.0, %v1841
        %1843 = vmatmul.f32.gmra.mxu0 %v475
        %v1844 = vpop.f32.mrf.mxu0
        %v1845 = vadd.f32 0.0, %v1844
        %1846 = vmatmul.f32.gmra.mxu0 %v478
        %v1847 = vpop.f32.mrf.mxu0
        %v1848 = vadd.f32 0.0, %v1847
        %1849 = vdwg.mxu0
        %v1850 = vld [vmem:[%s2] sm:$0xff]
        %v1851 = vld [vmem:[%s2 + $0x8] sm:$0x3]
        %v1854 = vperm.slane %v1850, 0
        %v1855 = vperm.slane %v1850, 1
        %v1856 = vperm.slane %v1850, 2
        %v1857 = vperm.slane %v1850, 3
        %v1858 = vperm.slane %v1850, 4
        %v1859 = vperm.slane %v1850, 5
        %v1860 = vperm.slane %v1850, 6
        %v1861 = vperm.slane %v1850, 7
        %v1862 = vperm.slane %v1851, 0
        %v1863 = vperm.slane %v1851, 1
        %v1874 = vmul.f32 %v498, %v1854
        %v1875 = vmul.f32 %v635, %v1855
        %v1876 = vmul.f32 %v772, %v1856
        %v1877 = vmul.f32 %v909, %v1857
        %v1878 = vmul.f32 %v1046, %v1858
        %v1879 = vmul.f32 %v1183, %v1859
        %v1880 = vmul.f32 %v1320, %v1860
        %v1881 = vmul.f32 %v1457, %v1861
        %v1882 = vmul.f32 %v1594, %v1862
        %v1883 = vmul.f32 %v1731, %v1863
        %v1884 = vmul.f32 %v501, %v1854
        %v1885 = vmul.f32 %v638, %v1855
        %v1886 = vmul.f32 %v775, %v1856
        %v1887 = vmul.f32 %v912, %v1857
        %v1888 = vmul.f32 %v1049, %v1858
        %v1889 = vmul.f32 %v1186, %v1859
        %v1890 = vmul.f32 %v1323, %v1860
        %v1891 = vmul.f32 %v1460, %v1861
        %v1892 = vmul.f32 %v1597, %v1862
        %v1893 = vmul.f32 %v1734, %v1863
        %v1894 = vmul.f32 %v504, %v1854
        %v1895 = vmul.f32 %v641, %v1855
        %v1896 = vmul.f32 %v778, %v1856
        %v1897 = vmul.f32 %v915, %v1857
        %v1898 = vmul.f32 %v1052, %v1858
        %v1899 = vmul.f32 %v1189, %v1859
        %v1900 = vmul.f32 %v1326, %v1860
        %v1901 = vmul.f32 %v1463, %v1861
        %v1902 = vmul.f32 %v1600, %v1862
        %v1903 = vmul.f32 %v1737, %v1863
        %v1904 = vmul.f32 %v507, %v1854
        %v1905 = vmul.f32 %v644, %v1855
        %v1906 = vmul.f32 %v781, %v1856
        %v1907 = vmul.f32 %v918, %v1857
        %v1908 = vmul.f32 %v1055, %v1858
        %v1909 = vmul.f32 %v1192, %v1859
        %v1910 = vmul.f32 %v1329, %v1860
        %v1911 = vmul.f32 %v1466, %v1861
        %v1912 = vmul.f32 %v1603, %v1862
        %v1913 = vmul.f32 %v1740, %v1863
        %v1914 = vmul.f32 %v510, %v1854
        %v1915 = vmul.f32 %v647, %v1855
        %v1916 = vmul.f32 %v784, %v1856
        %v1917 = vmul.f32 %v921, %v1857
        %v1918 = vmul.f32 %v1058, %v1858
        %v1919 = vmul.f32 %v1195, %v1859
        %v1920 = vmul.f32 %v1332, %v1860
        %v1921 = vmul.f32 %v1469, %v1861
        %v1922 = vmul.f32 %v1606, %v1862
        %v1923 = vmul.f32 %v1743, %v1863
        %v1924 = vmul.f32 %v513, %v1854
        %v1925 = vmul.f32 %v650, %v1855
        %v1926 = vmul.f32 %v787, %v1856
        %v1927 = vmul.f32 %v924, %v1857
        %v1928 = vmul.f32 %v1061, %v1858
        %v1929 = vmul.f32 %v1198, %v1859
        %v1930 = vmul.f32 %v1335, %v1860
        %v1931 = vmul.f32 %v1472, %v1861
        %v1932 = vmul.f32 %v1609, %v1862
        %v1933 = vmul.f32 %v1746, %v1863
        %v1934 = vmul.f32 %v516, %v1854
        %v1935 = vmul.f32 %v653, %v1855
        %v1936 = vmul.f32 %v790, %v1856
        %v1937 = vmul.f32 %v927, %v1857
        %v1938 = vmul.f32 %v1064, %v1858
        %v1939 = vmul.f32 %v1201, %v1859
        %v1940 = vmul.f32 %v1338, %v1860
        %v1941 = vmul.f32 %v1475, %v1861
        %v1942 = vmul.f32 %v1612, %v1862
        %v1943 = vmul.f32 %v1749, %v1863
        %v1944 = vmul.f32 %v519, %v1854
        %v1945 = vmul.f32 %v656, %v1855
        %v1946 = vmul.f32 %v793, %v1856
        %v1947 = vmul.f32 %v930, %v1857
        %v1948 = vmul.f32 %v1067, %v1858
        %v1949 = vmul.f32 %v1204, %v1859
        %v1950 = vmul.f32 %v1341, %v1860
        %v1951 = vmul.f32 %v1478, %v1861
        %v1952 = vmul.f32 %v1615, %v1862
        %v1953 = vmul.f32 %v1752, %v1863
        %v1954 = vmul.f32 %v522, %v1854
        %v1955 = vmul.f32 %v659, %v1855
        %v1956 = vmul.f32 %v796, %v1856
        %v1957 = vmul.f32 %v933, %v1857
        %v1958 = vmul.f32 %v1070, %v1858
        %v1959 = vmul.f32 %v1207, %v1859
        %v1960 = vmul.f32 %v1344, %v1860
        %v1961 = vmul.f32 %v1481, %v1861
        %v1962 = vmul.f32 %v1618, %v1862
        %v1963 = vmul.f32 %v1755, %v1863
        %v1964 = vmul.f32 %v525, %v1854
        %v1965 = vmul.f32 %v662, %v1855
        %v1966 = vmul.f32 %v799, %v1856
        %v1967 = vmul.f32 %v936, %v1857
        %v1968 = vmul.f32 %v1073, %v1858
        %v1969 = vmul.f32 %v1210, %v1859
        %v1970 = vmul.f32 %v1347, %v1860
        %v1971 = vmul.f32 %v1484, %v1861
        %v1972 = vmul.f32 %v1621, %v1862
        %v1973 = vmul.f32 %v1758, %v1863
        %v1974 = vmul.f32 %v528, %v1854
        %v1975 = vmul.f32 %v665, %v1855
        %v1976 = vmul.f32 %v802, %v1856
        %v1977 = vmul.f32 %v939, %v1857
        %v1978 = vmul.f32 %v1076, %v1858
        %v1979 = vmul.f32 %v1213, %v1859
        %v1980 = vmul.f32 %v1350, %v1860
        %v1981 = vmul.f32 %v1487, %v1861
        %v1982 = vmul.f32 %v1624, %v1862
        %v1983 = vmul.f32 %v1761, %v1863
        %v1984 = vmul.f32 %v531, %v1854
        %v1985 = vmul.f32 %v668, %v1855
        %v1986 = vmul.f32 %v805, %v1856
        %v1987 = vmul.f32 %v942, %v1857
        %v1988 = vmul.f32 %v1079, %v1858
        %v1989 = vmul.f32 %v1216, %v1859
        %v1990 = vmul.f32 %v1353, %v1860
        %v1991 = vmul.f32 %v1490, %v1861
        %v1992 = vmul.f32 %v1627, %v1862
        %v1993 = vmul.f32 %v1764, %v1863
        %v1994 = vmul.f32 %v534, %v1854
        %v1995 = vmul.f32 %v671, %v1855
        %v1996 = vmul.f32 %v808, %v1856
        %v1997 = vmul.f32 %v945, %v1857
        %v1998 = vmul.f32 %v1082, %v1858
        %v1999 = vmul.f32 %v1219, %v1859
        %v2000 = vmul.f32 %v1356, %v1860
        %v2001 = vmul.f32 %v1493, %v1861
        %v2002 = vmul.f32 %v1630, %v1862
        %v2003 = vmul.f32 %v1767, %v1863
        %v2004 = vmul.f32 %v537, %v1854
        %v2005 = vmul.f32 %v674, %v1855
        %v2006 = vmul.f32 %v811, %v1856
        %v2007 = vmul.f32 %v948, %v1857
        %v2008 = vmul.f32 %v1085, %v1858
        %v2009 = vmul.f32 %v1222, %v1859
        %v2010 = vmul.f32 %v1359, %v1860
        %v2011 = vmul.f32 %v1496, %v1861
        %v2012 = vmul.f32 %v1633, %v1862
        %v2013 = vmul.f32 %v1770, %v1863
        %v2014 = vmul.f32 %v540, %v1854
        %v2015 = vmul.f32 %v677, %v1855
        %v2016 = vmul.f32 %v814, %v1856
        %v2017 = vmul.f32 %v951, %v1857
        %v2018 = vmul.f32 %v1088, %v1858
        %v2019 = vmul.f32 %v1225, %v1859
        %v2020 = vmul.f32 %v1362, %v1860
        %v2021 = vmul.f32 %v1499, %v1861
        %v2022 = vmul.f32 %v1636, %v1862
        %v2023 = vmul.f32 %v1773, %v1863
        %v2024 = vmul.f32 %v543, %v1854
        %v2025 = vmul.f32 %v680, %v1855
        %v2026 = vmul.f32 %v817, %v1856
        %v2027 = vmul.f32 %v954, %v1857
        %v2028 = vmul.f32 %v1091, %v1858
        %v2029 = vmul.f32 %v1228, %v1859
        %v2030 = vmul.f32 %v1365, %v1860
        %v2031 = vmul.f32 %v1502, %v1861
        %v2032 = vmul.f32 %v1639, %v1862
        %v2033 = vmul.f32 %v1776, %v1863
        %v2034 = vmul.f32 %v546, %v1854
        %v2035 = vmul.f32 %v683, %v1855
        %v2036 = vmul.f32 %v820, %v1856
        %v2037 = vmul.f32 %v957, %v1857
        %v2038 = vmul.f32 %v1094, %v1858
        %v2039 = vmul.f32 %v1231, %v1859
        %v2040 = vmul.f32 %v1368, %v1860
        %v2041 = vmul.f32 %v1505, %v1861
        %v2042 = vmul.f32 %v1642, %v1862
        %v2043 = vmul.f32 %v1779, %v1863
        %v2044 = vmul.f32 %v549, %v1854
        %v2045 = vmul.f32 %v686, %v1855
        %v2046 = vmul.f32 %v823, %v1856
        %v2047 = vmul.f32 %v960, %v1857
        %v2048 = vmul.f32 %v1097, %v1858
        %v2049 = vmul.f32 %v1234, %v1859
        %v2050 = vmul.f32 %v1371, %v1860
        %v2051 = vmul.f32 %v1508, %v1861
        %v2052 = vmul.f32 %v1645, %v1862
        %v2053 = vmul.f32 %v1782, %v1863
        %v2054 = vmul.f32 %v552, %v1854
        %v2055 = vmul.f32 %v689, %v1855
        %v2056 = vmul.f32 %v826, %v1856
        %v2057 = vmul.f32 %v963, %v1857
        %v2058 = vmul.f32 %v1100, %v1858
        %v2059 = vmul.f32 %v1237, %v1859
        %v2060 = vmul.f32 %v1374, %v1860
        %v2061 = vmul.f32 %v1511, %v1861
        %v2062 = vmul.f32 %v1648, %v1862
        %v2063 = vmul.f32 %v1785, %v1863
        %v2064 = vmul.f32 %v555, %v1854
        %v2065 = vmul.f32 %v692, %v1855
        %v2066 = vmul.f32 %v829, %v1856
        %v2067 = vmul.f32 %v966, %v1857
        %v2068 = vmul.f32 %v1103, %v1858
        %v2069 = vmul.f32 %v1240, %v1859
        %v2070 = vmul.f32 %v1377, %v1860
        %v2071 = vmul.f32 %v1514, %v1861
        %v2072 = vmul.f32 %v1651, %v1862
        %v2073 = vmul.f32 %v1788, %v1863
        %v2074 = vmul.f32 %v558, %v1854
        %v2075 = vmul.f32 %v695, %v1855
        %v2076 = vmul.f32 %v832, %v1856
        %v2077 = vmul.f32 %v969, %v1857
        %v2078 = vmul.f32 %v1106, %v1858
        %v2079 = vmul.f32 %v1243, %v1859
        %v2080 = vmul.f32 %v1380, %v1860
        %v2081 = vmul.f32 %v1517, %v1861
        %v2082 = vmul.f32 %v1654, %v1862
        %v2083 = vmul.f32 %v1791, %v1863
        %v2084 = vmul.f32 %v561, %v1854
        %v2085 = vmul.f32 %v698, %v1855
        %v2086 = vmul.f32 %v835, %v1856
        %v2087 = vmul.f32 %v972, %v1857
        %v2088 = vmul.f32 %v1109, %v1858
        %v2089 = vmul.f32 %v1246, %v1859
        %v2090 = vmul.f32 %v1383, %v1860
        %v2091 = vmul.f32 %v1520, %v1861
        %v2092 = vmul.f32 %v1657, %v1862
        %v2093 = vmul.f32 %v1794, %v1863
        %v2094 = vmul.f32 %v564, %v1854
        %v2095 = vmul.f32 %v701, %v1855
        %v2096 = vmul.f32 %v838, %v1856
        %v2097 = vmul.f32 %v975, %v1857
        %v2098 = vmul.f32 %v1112, %v1858
        %v2099 = vmul.f32 %v1249, %v1859
        %v2100 = vmul.f32 %v1386, %v1860
        %v2101 = vmul.f32 %v1523, %v1861
        %v2102 = vmul.f32 %v1660, %v1862
        %v2103 = vmul.f32 %v1797, %v1863
        %v2104 = vmul.f32 %v567, %v1854
        %v2105 = vmul.f32 %v704, %v1855
        %v2106 = vmul.f32 %v841, %v1856
        %v2107 = vmul.f32 %v978, %v1857
        %v2108 = vmul.f32 %v1115, %v1858
        %v2109 = vmul.f32 %v1252, %v1859
        %v2110 = vmul.f32 %v1389, %v1860
        %v2111 = vmul.f32 %v1526, %v1861
        %v2112 = vmul.f32 %v1663, %v1862
        %v2113 = vmul.f32 %v1800, %v1863
        %v2114 = vmul.f32 %v570, %v1854
        %v2115 = vmul.f32 %v707, %v1855
        %v2116 = vmul.f32 %v844, %v1856
        %v2117 = vmul.f32 %v981, %v1857
        %v2118 = vmul.f32 %v1118, %v1858
        %v2119 = vmul.f32 %v1255, %v1859
        %v2120 = vmul.f32 %v1392, %v1860
        %v2121 = vmul.f32 %v1529, %v1861
        %v2122 = vmul.f32 %v1666, %v1862
        %v2123 = vmul.f32 %v1803, %v1863
        %v2124 = vmul.f32 %v573, %v1854
        %v2125 = vmul.f32 %v710, %v1855
        %v2126 = vmul.f32 %v847, %v1856
        %v2127 = vmul.f32 %v984, %v1857
        %v2128 = vmul.f32 %v1121, %v1858
        %v2129 = vmul.f32 %v1258, %v1859
        %v2130 = vmul.f32 %v1395, %v1860
        %v2131 = vmul.f32 %v1532, %v1861
        %v2132 = vmul.f32 %v1669, %v1862
        %v2133 = vmul.f32 %v1806, %v1863
        %v2134 = vmul.f32 %v576, %v1854
        %v2135 = vmul.f32 %v713, %v1855
        %v2136 = vmul.f32 %v850, %v1856
        %v2137 = vmul.f32 %v987, %v1857
        %v2138 = vmul.f32 %v1124, %v1858
        %v2139 = vmul.f32 %v1261, %v1859
        %v2140 = vmul.f32 %v1398, %v1860
        %v2141 = vmul.f32 %v1535, %v1861
        %v2142 = vmul.f32 %v1672, %v1862
        %v2143 = vmul.f32 %v1809, %v1863
        %v2144 = vmul.f32 %v579, %v1854
        %v2145 = vmul.f32 %v716, %v1855
        %v2146 = vmul.f32 %v853, %v1856
        %v2147 = vmul.f32 %v990, %v1857
        %v2148 = vmul.f32 %v1127, %v1858
        %v2149 = vmul.f32 %v1264, %v1859
        %v2150 = vmul.f32 %v1401, %v1860
        %v2151 = vmul.f32 %v1538, %v1861
        %v2152 = vmul.f32 %v1675, %v1862
        %v2153 = vmul.f32 %v1812, %v1863
        %v2154 = vmul.f32 %v582, %v1854
        %v2155 = vmul.f32 %v719, %v1855
        %v2156 = vmul.f32 %v856, %v1856
        %v2157 = vmul.f32 %v993, %v1857
        %v2158 = vmul.f32 %v1130, %v1858
        %v2159 = vmul.f32 %v1267, %v1859
        %v2160 = vmul.f32 %v1404, %v1860
        %v2161 = vmul.f32 %v1541, %v1861
        %v2162 = vmul.f32 %v1678, %v1862
        %v2163 = vmul.f32 %v1815, %v1863
        %v2164 = vmul.f32 %v585, %v1854
        %v2165 = vmul.f32 %v722, %v1855
        %v2166 = vmul.f32 %v859, %v1856
        %v2167 = vmul.f32 %v996, %v1857
        %v2168 = vmul.f32 %v1133, %v1858
        %v2169 = vmul.f32 %v1270, %v1859
        %v2170 = vmul.f32 %v1407, %v1860
        %v2171 = vmul.f32 %v1544, %v1861
        %v2172 = vmul.f32 %v1681, %v1862
        %v2173 = vmul.f32 %v1818, %v1863
        %v2174 = vmul.f32 %v588, %v1854
        %v2175 = vmul.f32 %v725, %v1855
        %v2176 = vmul.f32 %v862, %v1856
        %v2177 = vmul.f32 %v999, %v1857
        %v2178 = vmul.f32 %v1136, %v1858
        %v2179 = vmul.f32 %v1273, %v1859
        %v2180 = vmul.f32 %v1410, %v1860
        %v2181 = vmul.f32 %v1547, %v1861
        %v2182 = vmul.f32 %v1684, %v1862
        %v2183 = vmul.f32 %v1821, %v1863
        %v2184 = vmul.f32 %v591, %v1854
        %v2185 = vmul.f32 %v728, %v1855
        %v2186 = vmul.f32 %v865, %v1856
        %v2187 = vmul.f32 %v1002, %v1857
        %v2188 = vmul.f32 %v1139, %v1858
        %v2189 = vmul.f32 %v1276, %v1859
        %v2190 = vmul.f32 %v1413, %v1860
        %v2191 = vmul.f32 %v1550, %v1861
        %v2192 = vmul.f32 %v1687, %v1862
        %v2193 = vmul.f32 %v1824, %v1863
        %v2194 = vmul.f32 %v594, %v1854
        %v2195 = vmul.f32 %v731, %v1855
        %v2196 = vmul.f32 %v868, %v1856
        %v2197 = vmul.f32 %v1005, %v1857
        %v2198 = vmul.f32 %v1142, %v1858
        %v2199 = vmul.f32 %v1279, %v1859
        %v2200 = vmul.f32 %v1416, %v1860
        %v2201 = vmul.f32 %v1553, %v1861
        %v2202 = vmul.f32 %v1690, %v1862
        %v2203 = vmul.f32 %v1827, %v1863
        %v2204 = vmul.f32 %v597, %v1854
        %v2205 = vmul.f32 %v734, %v1855
        %v2206 = vmul.f32 %v871, %v1856
        %v2207 = vmul.f32 %v1008, %v1857
        %v2208 = vmul.f32 %v1145, %v1858
        %v2209 = vmul.f32 %v1282, %v1859
        %v2210 = vmul.f32 %v1419, %v1860
        %v2211 = vmul.f32 %v1556, %v1861
        %v2212 = vmul.f32 %v1693, %v1862
        %v2213 = vmul.f32 %v1830, %v1863
        %v2214 = vmul.f32 %v600, %v1854
        %v2215 = vmul.f32 %v737, %v1855
        %v2216 = vmul.f32 %v874, %v1856
        %v2217 = vmul.f32 %v1011, %v1857
        %v2218 = vmul.f32 %v1148, %v1858
        %v2219 = vmul.f32 %v1285, %v1859
        %v2220 = vmul.f32 %v1422, %v1860
        %v2221 = vmul.f32 %v1559, %v1861
        %v2222 = vmul.f32 %v1696, %v1862
        %v2223 = vmul.f32 %v1833, %v1863
        %v2224 = vmul.f32 %v603, %v1854
        %v2225 = vmul.f32 %v740, %v1855
        %v2226 = vmul.f32 %v877, %v1856
        %v2227 = vmul.f32 %v1014, %v1857
        %v2228 = vmul.f32 %v1151, %v1858
        %v2229 = vmul.f32 %v1288, %v1859
        %v2230 = vmul.f32 %v1425, %v1860
        %v2231 = vmul.f32 %v1562, %v1861
        %v2232 = vmul.f32 %v1699, %v1862
        %v2233 = vmul.f32 %v1836, %v1863
        %v2234 = vmul.f32 %v606, %v1854
        %v2235 = vmul.f32 %v743, %v1855
        %v2236 = vmul.f32 %v880, %v1856
        %v2237 = vmul.f32 %v1017, %v1857
        %v2238 = vmul.f32 %v1154, %v1858
        %v2239 = vmul.f32 %v1291, %v1859
        %v2240 = vmul.f32 %v1428, %v1860
        %v2241 = vmul.f32 %v1565, %v1861
        %v2242 = vmul.f32 %v1702, %v1862
        %v2243 = vmul.f32 %v1839, %v1863
        %v2244 = vmul.f32 %v609, %v1854
        %v2245 = vmul.f32 %v746, %v1855
        %v2246 = vmul.f32 %v883, %v1856
        %v2247 = vmul.f32 %v1020, %v1857
        %v2248 = vmul.f32 %v1157, %v1858
        %v2249 = vmul.f32 %v1294, %v1859
        %v2250 = vmul.f32 %v1431, %v1860
        %v2251 = vmul.f32 %v1568, %v1861
        %v2252 = vmul.f32 %v1705, %v1862
        %v2253 = vmul.f32 %v1842, %v1863
        %v2254 = vmul.f32 %v612, %v1854
        %v2255 = vmul.f32 %v749, %v1855
        %v2256 = vmul.f32 %v886, %v1856
        %v2257 = vmul.f32 %v1023, %v1857
        %v2258 = vmul.f32 %v1160, %v1858
        %v2259 = vmul.f32 %v1297, %v1859
        %v2260 = vmul.f32 %v1434, %v1860
        %v2261 = vmul.f32 %v1571, %v1861
        %v2262 = vmul.f32 %v1708, %v1862
        %v2263 = vmul.f32 %v1845, %v1863
        %v2264 = vmul.f32 %v615, %v1854
        %v2265 = vmul.f32 %v752, %v1855
        %v2266 = vmul.f32 %v889, %v1856
        %v2267 = vmul.f32 %v1026, %v1857
        %v2268 = vmul.f32 %v1163, %v1858
        %v2269 = vmul.f32 %v1300, %v1859
        %v2270 = vmul.f32 %v1437, %v1860
        %v2271 = vmul.f32 %v1574, %v1861
        %v2272 = vmul.f32 %v1711, %v1862
        %v2273 = vmul.f32 %v1848, %v1863
        %v2274 = vld [vmem:[%s3] sm:$0xff]
        %v2275 = vld [vmem:[%s3 + $0x8] sm:$0x3]
        %v2278 = vperm.slane %v2274, 0
        %v2279 = vperm.slane %v2274, 1
        %v2280 = vperm.slane %v2274, 2
        %v2281 = vperm.slane %v2274, 3
        %v2282 = vperm.slane %v2274, 4
        %v2283 = vperm.slane %v2274, 5
        %v2284 = vperm.slane %v2274, 6
        %v2285 = vperm.slane %v2274, 7
        %v2286 = vperm.slane %v2275, 0
        %v2287 = vperm.slane %v2275, 1
        %v2298 = vadd.f32 %v1874, %v2278
        %v2299 = vadd.f32 %v1875, %v2279
        %v2300 = vadd.f32 %v1876, %v2280
        %v2301 = vadd.f32 %v1877, %v2281
        %v2302 = vadd.f32 %v1878, %v2282
        %v2303 = vadd.f32 %v1879, %v2283
        %v2304 = vadd.f32 %v1880, %v2284
        %v2305 = vadd.f32 %v1881, %v2285
        %v2306 = vadd.f32 %v1882, %v2286
        %v2307 = vadd.f32 %v1883, %v2287
        %v2308 = vadd.f32 %v1884, %v2278
        %v2309 = vadd.f32 %v1885, %v2279
        %v2310 = vadd.f32 %v1886, %v2280
        %v2311 = vadd.f32 %v1887, %v2281
        %v2312 = vadd.f32 %v1888, %v2282
        %v2313 = vadd.f32 %v1889, %v2283
        %v2314 = vadd.f32 %v1890, %v2284
        %v2315 = vadd.f32 %v1891, %v2285
        %v2316 = vadd.f32 %v1892, %v2286
        %v2317 = vadd.f32 %v1893, %v2287
        %v2318 = vadd.f32 %v1894, %v2278
        %v2319 = vadd.f32 %v1895, %v2279
        %v2320 = vadd.f32 %v1896, %v2280
        %v2321 = vadd.f32 %v1897, %v2281
        %v2322 = vadd.f32 %v1898, %v2282
        %v2323 = vadd.f32 %v1899, %v2283
        %v2324 = vadd.f32 %v1900, %v2284
        %v2325 = vadd.f32 %v1901, %v2285
        %v2326 = vadd.f32 %v1902, %v2286
        %v2327 = vadd.f32 %v1903, %v2287
        %v2328 = vadd.f32 %v1904, %v2278
        %v2329 = vadd.f32 %v1905, %v2279
        %v2330 = vadd.f32 %v1906, %v2280
        %v2331 = vadd.f32 %v1907, %v2281
        %v2332 = vadd.f32 %v1908, %v2282
        %v2333 = vadd.f32 %v1909, %v2283
        %v2334 = vadd.f32 %v1910, %v2284
        %v2335 = vadd.f32 %v1911, %v2285
        %v2336 = vadd.f32 %v1912, %v2286
        %v2337 = vadd.f32 %v1913, %v2287
        %v2338 = vadd.f32 %v1914, %v2278
        %v2339 = vadd.f32 %v1915, %v2279
        %v2340 = vadd.f32 %v1916, %v2280
        %v2341 = vadd.f32 %v1917, %v2281
        %v2342 = vadd.f32 %v1918, %v2282
        %v2343 = vadd.f32 %v1919, %v2283
        %v2344 = vadd.f32 %v1920, %v2284
        %v2345 = vadd.f32 %v1921, %v2285
        %v2346 = vadd.f32 %v1922, %v2286
        %v2347 = vadd.f32 %v1923, %v2287
        %v2348 = vadd.f32 %v1924, %v2278
        %v2349 = vadd.f32 %v1925, %v2279
        %v2350 = vadd.f32 %v1926, %v2280
        %v2351 = vadd.f32 %v1927, %v2281
        %v2352 = vadd.f32 %v1928, %v2282
        %v2353 = vadd.f32 %v1929, %v2283
        %v2354 = vadd.f32 %v1930, %v2284
        %v2355 = vadd.f32 %v1931, %v2285
        %v2356 = vadd.f32 %v1932, %v2286
        %v2357 = vadd.f32 %v1933, %v2287
        %v2358 = vadd.f32 %v1934, %v2278
        %v2359 = vadd.f32 %v1935, %v2279
        %v2360 = vadd.f32 %v1936, %v2280
        %v2361 = vadd.f32 %v1937, %v2281
        %v2362 = vadd.f32 %v1938, %v2282
        %v2363 = vadd.f32 %v1939, %v2283
        %v2364 = vadd.f32 %v1940, %v2284
        %v2365 = vadd.f32 %v1941, %v2285
        %v2366 = vadd.f32 %v1942, %v2286
        %v2367 = vadd.f32 %v1943, %v2287
        %v2368 = vadd.f32 %v1944, %v2278
        %v2369 = vadd.f32 %v1945, %v2279
        %v2370 = vadd.f32 %v1946, %v2280
        %v2371 = vadd.f32 %v1947, %v2281
        %v2372 = vadd.f32 %v1948, %v2282
        %v2373 = vadd.f32 %v1949, %v2283
        %v2374 = vadd.f32 %v1950, %v2284
        %v2375 = vadd.f32 %v1951, %v2285
        %v2376 = vadd.f32 %v1952, %v2286
        %v2377 = vadd.f32 %v1953, %v2287
        %v2378 = vadd.f32 %v1954, %v2278
        %v2379 = vadd.f32 %v1955, %v2279
        %v2380 = vadd.f32 %v1956, %v2280
        %v2381 = vadd.f32 %v1957, %v2281
        %v2382 = vadd.f32 %v1958, %v2282
        %v2383 = vadd.f32 %v1959, %v2283
        %v2384 = vadd.f32 %v1960, %v2284
        %v2385 = vadd.f32 %v1961, %v2285
        %v2386 = vadd.f32 %v1962, %v2286
        %v2387 = vadd.f32 %v1963, %v2287
        %v2388 = vadd.f32 %v1964, %v2278
        %v2389 = vadd.f32 %v1965, %v2279
        %v2390 = vadd.f32 %v1966, %v2280
        %v2391 = vadd.f32 %v1967, %v2281
        %v2392 = vadd.f32 %v1968, %v2282
        %v2393 = vadd.f32 %v1969, %v2283
        %v2394 = vadd.f32 %v1970, %v2284
        %v2395 = vadd.f32 %v1971, %v2285
        %v2396 = vadd.f32 %v1972, %v2286
        %v2397 = vadd.f32 %v1973, %v2287
        %v2398 = vadd.f32 %v1974, %v2278
        %v2399 = vadd.f32 %v1975, %v2279
        %v2400 = vadd.f32 %v1976, %v2280
        %v2401 = vadd.f32 %v1977, %v2281
        %v2402 = vadd.f32 %v1978, %v2282
        %v2403 = vadd.f32 %v1979, %v2283
        %v2404 = vadd.f32 %v1980, %v2284
        %v2405 = vadd.f32 %v1981, %v2285
        %v2406 = vadd.f32 %v1982, %v2286
        %v2407 = vadd.f32 %v1983, %v2287
        %v2408 = vadd.f32 %v1984, %v2278
        %v2409 = vadd.f32 %v1985, %v2279
        %v2410 = vadd.f32 %v1986, %v2280
        %v2411 = vadd.f32 %v1987, %v2281
        %v2412 = vadd.f32 %v1988, %v2282
        %v2413 = vadd.f32 %v1989, %v2283
        %v2414 = vadd.f32 %v1990, %v2284
        %v2415 = vadd.f32 %v1991, %v2285
        %v2416 = vadd.f32 %v1992, %v2286
        %v2417 = vadd.f32 %v1993, %v2287
        %v2418 = vadd.f32 %v1994, %v2278
        %v2419 = vadd.f32 %v1995, %v2279
        %v2420 = vadd.f32 %v1996, %v2280
        %v2421 = vadd.f32 %v1997, %v2281
        %v2422 = vadd.f32 %v1998, %v2282
        %v2423 = vadd.f32 %v1999, %v2283
        %v2424 = vadd.f32 %v2000, %v2284
        %v2425 = vadd.f32 %v2001, %v2285
        %v2426 = vadd.f32 %v2002, %v2286
        %v2427 = vadd.f32 %v2003, %v2287
        %v2428 = vadd.f32 %v2004, %v2278
        %v2429 = vadd.f32 %v2005, %v2279
        %v2430 = vadd.f32 %v2006, %v2280
        %v2431 = vadd.f32 %v2007, %v2281
        %v2432 = vadd.f32 %v2008, %v2282
        %v2433 = vadd.f32 %v2009, %v2283
        %v2434 = vadd.f32 %v2010, %v2284
        %v2435 = vadd.f32 %v2011, %v2285
        %v2436 = vadd.f32 %v2012, %v2286
        %v2437 = vadd.f32 %v2013, %v2287
        %v2438 = vadd.f32 %v2014, %v2278
        %v2439 = vadd.f32 %v2015, %v2279
        %v2440 = vadd.f32 %v2016, %v2280
        %v2441 = vadd.f32 %v2017, %v2281
        %v2442 = vadd.f32 %v2018, %v2282
        %v2443 = vadd.f32 %v2019, %v2283
        %v2444 = vadd.f32 %v2020, %v2284
        %v2445 = vadd.f32 %v2021, %v2285
        %v2446 = vadd.f32 %v2022, %v2286
        %v2447 = vadd.f32 %v2023, %v2287
        %v2448 = vadd.f32 %v2024, %v2278
        %v2449 = vadd.f32 %v2025, %v2279
        %v2450 = vadd.f32 %v2026, %v2280
        %v2451 = vadd.f32 %v2027, %v2281
        %v2452 = vadd.f32 %v2028, %v2282
        %v2453 = vadd.f32 %v2029, %v2283
        %v2454 = vadd.f32 %v2030, %v2284
        %v2455 = vadd.f32 %v2031, %v2285
        %v2456 = vadd.f32 %v2032, %v2286
        %v2457 = vadd.f32 %v2033, %v2287
        %v2458 = vadd.f32 %v2034, %v2278
        %v2459 = vadd.f32 %v2035, %v2279
        %v2460 = vadd.f32 %v2036, %v2280
        %v2461 = vadd.f32 %v2037, %v2281
        %v2462 = vadd.f32 %v2038, %v2282
        %v2463 = vadd.f32 %v2039, %v2283
        %v2464 = vadd.f32 %v2040, %v2284
        %v2465 = vadd.f32 %v2041, %v2285
        %v2466 = vadd.f32 %v2042, %v2286
        %v2467 = vadd.f32 %v2043, %v2287
        %v2468 = vadd.f32 %v2044, %v2278
        %v2469 = vadd.f32 %v2045, %v2279
        %v2470 = vadd.f32 %v2046, %v2280
        %v2471 = vadd.f32 %v2047, %v2281
        %v2472 = vadd.f32 %v2048, %v2282
        %v2473 = vadd.f32 %v2049, %v2283
        %v2474 = vadd.f32 %v2050, %v2284
        %v2475 = vadd.f32 %v2051, %v2285
        %v2476 = vadd.f32 %v2052, %v2286
        %v2477 = vadd.f32 %v2053, %v2287
        %v2478 = vadd.f32 %v2054, %v2278
        %v2479 = vadd.f32 %v2055, %v2279
        %v2480 = vadd.f32 %v2056, %v2280
        %v2481 = vadd.f32 %v2057, %v2281
        %v2482 = vadd.f32 %v2058, %v2282
        %v2483 = vadd.f32 %v2059, %v2283
        %v2484 = vadd.f32 %v2060, %v2284
        %v2485 = vadd.f32 %v2061, %v2285
        %v2486 = vadd.f32 %v2062, %v2286
        %v2487 = vadd.f32 %v2063, %v2287
        %v2488 = vadd.f32 %v2064, %v2278
        %v2489 = vadd.f32 %v2065, %v2279
        %v2490 = vadd.f32 %v2066, %v2280
        %v2491 = vadd.f32 %v2067, %v2281
        %v2492 = vadd.f32 %v2068, %v2282
        %v2493 = vadd.f32 %v2069, %v2283
        %v2494 = vadd.f32 %v2070, %v2284
        %v2495 = vadd.f32 %v2071, %v2285
        %v2496 = vadd.f32 %v2072, %v2286
        %v2497 = vadd.f32 %v2073, %v2287
        %v2498 = vadd.f32 %v2074, %v2278
        %v2499 = vadd.f32 %v2075, %v2279
        %v2500 = vadd.f32 %v2076, %v2280
        %v2501 = vadd.f32 %v2077, %v2281
        %v2502 = vadd.f32 %v2078, %v2282
        %v2503 = vadd.f32 %v2079, %v2283
        %v2504 = vadd.f32 %v2080, %v2284
        %v2505 = vadd.f32 %v2081, %v2285
        %v2506 = vadd.f32 %v2082, %v2286
        %v2507 = vadd.f32 %v2083, %v2287
        %v2508 = vadd.f32 %v2084, %v2278
        %v2509 = vadd.f32 %v2085, %v2279
        %v2510 = vadd.f32 %v2086, %v2280
        %v2511 = vadd.f32 %v2087, %v2281
        %v2512 = vadd.f32 %v2088, %v2282
        %v2513 = vadd.f32 %v2089, %v2283
        %v2514 = vadd.f32 %v2090, %v2284
        %v2515 = vadd.f32 %v2091, %v2285
        %v2516 = vadd.f32 %v2092, %v2286
        %v2517 = vadd.f32 %v2093, %v2287
        %v2518 = vadd.f32 %v2094, %v2278
        %v2519 = vadd.f32 %v2095, %v2279
        %v2520 = vadd.f32 %v2096, %v2280
        %v2521 = vadd.f32 %v2097, %v2281
        %v2522 = vadd.f32 %v2098, %v2282
        %v2523 = vadd.f32 %v2099, %v2283
        %v2524 = vadd.f32 %v2100, %v2284
        %v2525 = vadd.f32 %v2101, %v2285
        %v2526 = vadd.f32 %v2102, %v2286
        %v2527 = vadd.f32 %v2103, %v2287
        %v2528 = vadd.f32 %v2104, %v2278
        %v2529 = vadd.f32 %v2105, %v2279
        %v2530 = vadd.f32 %v2106, %v2280
        %v2531 = vadd.f32 %v2107, %v2281
        %v2532 = vadd.f32 %v2108, %v2282
        %v2533 = vadd.f32 %v2109, %v2283
        %v2534 = vadd.f32 %v2110, %v2284
        %v2535 = vadd.f32 %v2111, %v2285
        %v2536 = vadd.f32 %v2112, %v2286
        %v2537 = vadd.f32 %v2113, %v2287
        %v2538 = vadd.f32 %v2114, %v2278
        %v2539 = vadd.f32 %v2115, %v2279
        %v2540 = vadd.f32 %v2116, %v2280
        %v2541 = vadd.f32 %v2117, %v2281
        %v2542 = vadd.f32 %v2118, %v2282
        %v2543 = vadd.f32 %v2119, %v2283
        %v2544 = vadd.f32 %v2120, %v2284
        %v2545 = vadd.f32 %v2121, %v2285
        %v2546 = vadd.f32 %v2122, %v2286
        %v2547 = vadd.f32 %v2123, %v2287
        %v2548 = vadd.f32 %v2124, %v2278
        %v2549 = vadd.f32 %v2125, %v2279
        %v2550 = vadd.f32 %v2126, %v2280
        %v2551 = vadd.f32 %v2127, %v2281
        %v2552 = vadd.f32 %v2128, %v2282
        %v2553 = vadd.f32 %v2129, %v2283
        %v2554 = vadd.f32 %v2130, %v2284
        %v2555 = vadd.f32 %v2131, %v2285
        %v2556 = vadd.f32 %v2132, %v2286
        %v2557 = vadd.f32 %v2133, %v2287
        %v2558 = vadd.f32 %v2134, %v2278
        %v2559 = vadd.f32 %v2135, %v2279
        %v2560 = vadd.f32 %v2136, %v2280
        %v2561 = vadd.f32 %v2137, %v2281
        %v2562 = vadd.f32 %v2138, %v2282
        %v2563 = vadd.f32 %v2139, %v2283
        %v2564 = vadd.f32 %v2140, %v2284
        %v2565 = vadd.f32 %v2141, %v2285
        %v2566 = vadd.f32 %v2142, %v2286
        %v2567 = vadd.f32 %v2143, %v2287
        %v2568 = vadd.f32 %v2144, %v2278
        %v2569 = vadd.f32 %v2145, %v2279
        %v2570 = vadd.f32 %v2146, %v2280
        %v2571 = vadd.f32 %v2147, %v2281
        %v2572 = vadd.f32 %v2148, %v2282
        %v2573 = vadd.f32 %v2149, %v2283
        %v2574 = vadd.f32 %v2150, %v2284
        %v2575 = vadd.f32 %v2151, %v2285
        %v2576 = vadd.f32 %v2152, %v2286
        %v2577 = vadd.f32 %v2153, %v2287
        %v2578 = vadd.f32 %v2154, %v2278
        %v2579 = vadd.f32 %v2155, %v2279
        %v2580 = vadd.f32 %v2156, %v2280
        %v2581 = vadd.f32 %v2157, %v2281
        %v2582 = vadd.f32 %v2158, %v2282
        %v2583 = vadd.f32 %v2159, %v2283
        %v2584 = vadd.f32 %v2160, %v2284
        %v2585 = vadd.f32 %v2161, %v2285
        %v2586 = vadd.f32 %v2162, %v2286
        %v2587 = vadd.f32 %v2163, %v2287
        %v2588 = vadd.f32 %v2164, %v2278
        %v2589 = vadd.f32 %v2165, %v2279
        %v2590 = vadd.f32 %v2166, %v2280
        %v2591 = vadd.f32 %v2167, %v2281
        %v2592 = vadd.f32 %v2168, %v2282
        %v2593 = vadd.f32 %v2169, %v2283
        %v2594 = vadd.f32 %v2170, %v2284
        %v2595 = vadd.f32 %v2171, %v2285
        %v2596 = vadd.f32 %v2172, %v2286
        %v2597 = vadd.f32 %v2173, %v2287
        %v2598 = vadd.f32 %v2174, %v2278
        %v2599 = vadd.f32 %v2175, %v2279
        %v2600 = vadd.f32 %v2176, %v2280
        %v2601 = vadd.f32 %v2177, %v2281
        %v2602 = vadd.f32 %v2178, %v2282
        %v2603 = vadd.f32 %v2179, %v2283
        %v2604 = vadd.f32 %v2180, %v2284
        %v2605 = vadd.f32 %v2181, %v2285
        %v2606 = vadd.f32 %v2182, %v2286
        %v2607 = vadd.f32 %v2183, %v2287
        %v2608 = vadd.f32 %v2184, %v2278
        %v2609 = vadd.f32 %v2185, %v2279
        %v2610 = vadd.f32 %v2186, %v2280
        %v2611 = vadd.f32 %v2187, %v2281
        %v2612 = vadd.f32 %v2188, %v2282
        %v2613 = vadd.f32 %v2189, %v2283
        %v2614 = vadd.f32 %v2190, %v2284
        %v2615 = vadd.f32 %v2191, %v2285
        %v2616 = vadd.f32 %v2192, %v2286
        %v2617 = vadd.f32 %v2193, %v2287
        %v2618 = vadd.f32 %v2194, %v2278
        %v2619 = vadd.f32 %v2195, %v2279
        %v2620 = vadd.f32 %v2196, %v2280
        %v2621 = vadd.f32 %v2197, %v2281
        %v2622 = vadd.f32 %v2198, %v2282
        %v2623 = vadd.f32 %v2199, %v2283
        %v2624 = vadd.f32 %v2200, %v2284
        %v2625 = vadd.f32 %v2201, %v2285
        %v2626 = vadd.f32 %v2202, %v2286
        %v2627 = vadd.f32 %v2203, %v2287
        %v2628 = vadd.f32 %v2204, %v2278
        %v2629 = vadd.f32 %v2205, %v2279
        %v2630 = vadd.f32 %v2206, %v2280
        %v2631 = vadd.f32 %v2207, %v2281
        %v2632 = vadd.f32 %v2208, %v2282
        %v2633 = vadd.f32 %v2209, %v2283
        %v2634 = vadd.f32 %v2210, %v2284
        %v2635 = vadd.f32 %v2211, %v2285
        %v2636 = vadd.f32 %v2212, %v2286
        %v2637 = vadd.f32 %v2213, %v2287
        %v2638 = vadd.f32 %v2214, %v2278
        %v2639 = vadd.f32 %v2215, %v2279
        %v2640 = vadd.f32 %v2216, %v2280
        %v2641 = vadd.f32 %v2217, %v2281
        %v2642 = vadd.f32 %v2218, %v2282
        %v2643 = vadd.f32 %v2219, %v2283
        %v2644 = vadd.f32 %v2220, %v2284
        %v2645 = vadd.f32 %v2221, %v2285
        %v2646 = vadd.f32 %v2222, %v2286
        %v2647 = vadd.f32 %v2223, %v2287
        %v2648 = vadd.f32 %v2224, %v2278
        %v2649 = vadd.f32 %v2225, %v2279
        %v2650 = vadd.f32 %v2226, %v2280
        %v2651 = vadd.f32 %v2227, %v2281
        %v2652 = vadd.f32 %v2228, %v2282
        %v2653 = vadd.f32 %v2229, %v2283
        %v2654 = vadd.f32 %v2230, %v2284
        %v2655 = vadd.f32 %v2231, %v2285
        %v2656 = vadd.f32 %v2232, %v2286
        %v2657 = vadd.f32 %v2233, %v2287
        %v2658 = vadd.f32 %v2234, %v2278
        %v2659 = vadd.f32 %v2235, %v2279
        %v2660 = vadd.f32 %v2236, %v2280
        %v2661 = vadd.f32 %v2237, %v2281
        %v2662 = vadd.f32 %v2238, %v2282
        %v2663 = vadd.f32 %v2239, %v2283
        %v2664 = vadd.f32 %v2240, %v2284
        %v2665 = vadd.f32 %v2241, %v2285
        %v2666 = vadd.f32 %v2242, %v2286
        %v2667 = vadd.f32 %v2243, %v2287
        %v2668 = vadd.f32 %v2244, %v2278
        %v2669 = vadd.f32 %v2245, %v2279
        %v2670 = vadd.f32 %v2246, %v2280
        %v2671 = vadd.f32 %v2247, %v2281
        %v2672 = vadd.f32 %v2248, %v2282
        %v2673 = vadd.f32 %v2249, %v2283
        %v2674 = vadd.f32 %v2250, %v2284
        %v2675 = vadd.f32 %v2251, %v2285
        %v2676 = vadd.f32 %v2252, %v2286
        %v2677 = vadd.f32 %v2253, %v2287
        %v2678 = vadd.f32 %v2254, %v2278
        %v2679 = vadd.f32 %v2255, %v2279
        %v2680 = vadd.f32 %v2256, %v2280
        %v2681 = vadd.f32 %v2257, %v2281
        %v2682 = vadd.f32 %v2258, %v2282
        %v2683 = vadd.f32 %v2259, %v2283
        %v2684 = vadd.f32 %v2260, %v2284
        %v2685 = vadd.f32 %v2261, %v2285
        %v2686 = vadd.f32 %v2262, %v2286
        %v2687 = vadd.f32 %v2263, %v2287
        %v2688 = vadd.f32 %v2264, %v2278
        %v2689 = vadd.f32 %v2265, %v2279
        %v2690 = vadd.f32 %v2266, %v2280
        %v2691 = vadd.f32 %v2267, %v2281
        %v2692 = vadd.f32 %v2268, %v2282
        %v2693 = vadd.f32 %v2269, %v2283
        %v2694 = vadd.f32 %v2270, %v2284
        %v2695 = vadd.f32 %v2271, %v2285
        %v2696 = vadd.f32 %v2272, %v2286
        %v2697 = vadd.f32 %v2273, %v2287
        %v2698 = vmax.f32 %v2298, %v2308
        %v2699 = vmax.f32 %v2698, %v2318
        %v2700 = vmax.f32 %v2699, %v2328
        %v2701 = vmax.f32 %v2700, %v2338
        %v2702 = vmax.f32 %v2701, %v2348
        %v2703 = vmax.f32 %v2702, %v2358
        %v2704 = vmax.f32 %v2703, %v2368
        %v2705 = vmax.f32 %v2704, %v2378
        %v2706 = vmax.f32 %v2705, %v2388
        %v2707 = vmax.f32 %v2706, %v2398
        %v2708 = vmax.f32 %v2707, %v2408
        %v2709 = vmax.f32 %v2708, %v2418
        %v2710 = vmax.f32 %v2709, %v2428
        %v2711 = vmax.f32 %v2710, %v2438
        %v2712 = vmax.f32 %v2711, %v2448
        %v2713 = vmax.f32 %v2712, %v2458
        %v2714 = vmax.f32 %v2713, %v2468
        %v2715 = vmax.f32 %v2714, %v2478
        %v2716 = vmax.f32 %v2715, %v2488
        %v2717 = vmax.f32 %v2716, %v2498
        %v2718 = vmax.f32 %v2717, %v2508
        %v2719 = vmax.f32 %v2718, %v2518
        %v2720 = vmax.f32 %v2719, %v2528
        %v2721 = vmax.f32 %v2720, %v2538
        %v2722 = vmax.f32 %v2721, %v2548
        %v2723 = vmax.f32 %v2722, %v2558
        %v2724 = vmax.f32 %v2723, %v2568
        %v2725 = vmax.f32 %v2724, %v2578
        %v2726 = vmax.f32 %v2725, %v2588
        %v2727 = vmax.f32 %v2726, %v2598
        %v2728 = vmax.f32 %v2727, %v2608
        %v2729 = vmax.f32 %v2728, %v2618
        %v2730 = vmax.f32 %v2729, %v2628
        %v2731 = vmax.f32 %v2730, %v2638
        %v2732 = vmax.f32 %v2731, %v2648
        %v2733 = vmax.f32 %v2732, %v2658
        %v2734 = vmax.f32 %v2733, %v2668
        %v2735 = vmax.f32 %v2734, %v2678
        %v2736 = vmax.f32 %v2735, %v2688
        %v2737 = vrot.slane %v2736, 4
        %v2738 = vmax.f32 %v2736, %v2737
        %v2739 = vrot.slane %v2738, 2
        %v2740 = vmax.f32 %v2738, %v2739
        %v2741 = vrot.slane %v2740, 1
        %v2742 = vmax.f32 %v2740, %v2741
        %v2743 = vmax.f32 %v2299, %v2309
        %v2744 = vmax.f32 %v2743, %v2319
        %v2745 = vmax.f32 %v2744, %v2329
        %v2746 = vmax.f32 %v2745, %v2339
        %v2747 = vmax.f32 %v2746, %v2349
        %v2748 = vmax.f32 %v2747, %v2359
        %v2749 = vmax.f32 %v2748, %v2369
        %v2750 = vmax.f32 %v2749, %v2379
        %v2751 = vmax.f32 %v2750, %v2389
        %v2752 = vmax.f32 %v2751, %v2399
        %v2753 = vmax.f32 %v2752, %v2409
        %v2754 = vmax.f32 %v2753, %v2419
        %v2755 = vmax.f32 %v2754, %v2429
        %v2756 = vmax.f32 %v2755, %v2439
        %v2757 = vmax.f32 %v2756, %v2449
        %v2758 = vmax.f32 %v2757, %v2459
        %v2759 = vmax.f32 %v2758, %v2469
        %v2760 = vmax.f32 %v2759, %v2479
        %v2761 = vmax.f32 %v2760, %v2489
        %v2762 = vmax.f32 %v2761, %v2499
        %v2763 = vmax.f32 %v2762, %v2509
        %v2764 = vmax.f32 %v2763, %v2519
        %v2765 = vmax.f32 %v2764, %v2529
        %v2766 = vmax.f32 %v2765, %v2539
        %v2767 = vmax.f32 %v2766, %v2549
        %v2768 = vmax.f32 %v2767, %v2559
        %v2769 = vmax.f32 %v2768, %v2569
        %v2770 = vmax.f32 %v2769, %v2579
        %v2771 = vmax.f32 %v2770, %v2589
        %v2772 = vmax.f32 %v2771, %v2599
        %v2773 = vmax.f32 %v2772, %v2609
        %v2774 = vmax.f32 %v2773, %v2619
        %v2775 = vmax.f32 %v2774, %v2629
        %v2776 = vmax.f32 %v2775, %v2639
        %v2777 = vmax.f32 %v2776, %v2649
        %v2778 = vmax.f32 %v2777, %v2659
        %v2779 = vmax.f32 %v2778, %v2669
        %v2780 = vmax.f32 %v2779, %v2679
        %v2781 = vmax.f32 %v2780, %v2689
        %v2782 = vrot.slane %v2781, 4
        %v2783 = vmax.f32 %v2781, %v2782
        %v2784 = vrot.slane %v2783, 2
        %v2785 = vmax.f32 %v2783, %v2784
        %v2786 = vrot.slane %v2785, 1
        %v2787 = vmax.f32 %v2785, %v2786
        %v2788 = vmax.f32 %v2300, %v2310
        %v2789 = vmax.f32 %v2788, %v2320
        %v2790 = vmax.f32 %v2789, %v2330
        %v2791 = vmax.f32 %v2790, %v2340
        %v2792 = vmax.f32 %v2791, %v2350
        %v2793 = vmax.f32 %v2792, %v2360
        %v2794 = vmax.f32 %v2793, %v2370
        %v2795 = vmax.f32 %v2794, %v2380
        %v2796 = vmax.f32 %v2795, %v2390
        %v2797 = vmax.f32 %v2796, %v2400
        %v2798 = vmax.f32 %v2797, %v2410
        %v2799 = vmax.f32 %v2798, %v2420
        %v2800 = vmax.f32 %v2799, %v2430
        %v2801 = vmax.f32 %v2800, %v2440
        %v2802 = vmax.f32 %v2801, %v2450
        %v2803 = vmax.f32 %v2802, %v2460
        %v2804 = vmax.f32 %v2803, %v2470
        %v2805 = vmax.f32 %v2804, %v2480
        %v2806 = vmax.f32 %v2805, %v2490
        %v2807 = vmax.f32 %v2806, %v2500
        %v2808 = vmax.f32 %v2807, %v2510
        %v2809 = vmax.f32 %v2808, %v2520
        %v2810 = vmax.f32 %v2809, %v2530
        %v2811 = vmax.f32 %v2810, %v2540
        %v2812 = vmax.f32 %v2811, %v2550
        %v2813 = vmax.f32 %v2812, %v2560
        %v2814 = vmax.f32 %v2813, %v2570
        %v2815 = vmax.f32 %v2814, %v2580
        %v2816 = vmax.f32 %v2815, %v2590
        %v2817 = vmax.f32 %v2816, %v2600
        %v2818 = vmax.f32 %v2817, %v2610
        %v2819 = vmax.f32 %v2818, %v2620
        %v2820 = vmax.f32 %v2819, %v2630
        %v2821 = vmax.f32 %v2820, %v2640
        %v2822 = vmax.f32 %v2821, %v2650
        %v2823 = vmax.f32 %v2822, %v2660
        %v2824 = vmax.f32 %v2823, %v2670
        %v2825 = vmax.f32 %v2824, %v2680
        %v2826 = vmax.f32 %v2825, %v2690
        %v2827 = vrot.slane %v2826, 4
        %v2828 = vmax.f32 %v2826, %v2827
        %v2829 = vrot.slane %v2828, 2
        %v2830 = vmax.f32 %v2828, %v2829
        %v2831 = vrot.slane %v2830, 1
        %v2832 = vmax.f32 %v2830, %v2831
        %v2833 = vmax.f32 %v2301, %v2311
        %v2834 = vmax.f32 %v2833, %v2321
        %v2835 = vmax.f32 %v2834, %v2331
        %v2836 = vmax.f32 %v2835, %v2341
        %v2837 = vmax.f32 %v2836, %v2351
        %v2838 = vmax.f32 %v2837, %v2361
        %v2839 = vmax.f32 %v2838, %v2371
        %v2840 = vmax.f32 %v2839, %v2381
        %v2841 = vmax.f32 %v2840, %v2391
        %v2842 = vmax.f32 %v2841, %v2401
        %v2843 = vmax.f32 %v2842, %v2411
        %v2844 = vmax.f32 %v2843, %v2421
        %v2845 = vmax.f32 %v2844, %v2431
        %v2846 = vmax.f32 %v2845, %v2441
        %v2847 = vmax.f32 %v2846, %v2451
        %v2848 = vmax.f32 %v2847, %v2461
        %v2849 = vmax.f32 %v2848, %v2471
        %v2850 = vmax.f32 %v2849, %v2481
        %v2851 = vmax.f32 %v2850, %v2491
        %v2852 = vmax.f32 %v2851, %v2501
        %v2853 = vmax.f32 %v2852, %v2511
        %v2854 = vmax.f32 %v2853, %v2521
        %v2855 = vmax.f32 %v2854, %v2531
        %v2856 = vmax.f32 %v2855, %v2541
        %v2857 = vmax.f32 %v2856, %v2551
        %v2858 = vmax.f32 %v2857, %v2561
        %v2859 = vmax.f32 %v2858, %v2571
        %v2860 = vmax.f32 %v2859, %v2581
        %v2861 = vmax.f32 %v2860, %v2591
        %v2862 = vmax.f32 %v2861, %v2601
        %v2863 = vmax.f32 %v2862, %v2611
        %v2864 = vmax.f32 %v2863, %v2621
        %v2865 = vmax.f32 %v2864, %v2631
        %v2866 = vmax.f32 %v2865, %v2641
        %v2867 = vmax.f32 %v2866, %v2651
        %v2868 = vmax.f32 %v2867, %v2661
        %v2869 = vmax.f32 %v2868, %v2671
        %v2870 = vmax.f32 %v2869, %v2681
        %v2871 = vmax.f32 %v2870, %v2691
        %v2872 = vrot.slane %v2871, 4
        %v2873 = vmax.f32 %v2871, %v2872
        %v2874 = vrot.slane %v2873, 2
        %v2875 = vmax.f32 %v2873, %v2874
        %v2876 = vrot.slane %v2875, 1
        %v2877 = vmax.f32 %v2875, %v2876
        %v2878 = vmax.f32 %v2302, %v2312
        %v2879 = vmax.f32 %v2878, %v2322
        %v2880 = vmax.f32 %v2879, %v2332
        %v2881 = vmax.f32 %v2880, %v2342
        %v2882 = vmax.f32 %v2881, %v2352
        %v2883 = vmax.f32 %v2882, %v2362
        %v2884 = vmax.f32 %v2883, %v2372
        %v2885 = vmax.f32 %v2884, %v2382
        %v2886 = vmax.f32 %v2885, %v2392
        %v2887 = vmax.f32 %v2886, %v2402
        %v2888 = vmax.f32 %v2887, %v2412
        %v2889 = vmax.f32 %v2888, %v2422
        %v2890 = vmax.f32 %v2889, %v2432
        %v2891 = vmax.f32 %v2890, %v2442
        %v2892 = vmax.f32 %v2891, %v2452
        %v2893 = vmax.f32 %v2892, %v2462
        %v2894 = vmax.f32 %v2893, %v2472
        %v2895 = vmax.f32 %v2894, %v2482
        %v2896 = vmax.f32 %v2895, %v2492
        %v2897 = vmax.f32 %v2896, %v2502
        %v2898 = vmax.f32 %v2897, %v2512
        %v2899 = vmax.f32 %v2898, %v2522
        %v2900 = vmax.f32 %v2899, %v2532
        %v2901 = vmax.f32 %v2900, %v2542
        %v2902 = vmax.f32 %v2901, %v2552
        %v2903 = vmax.f32 %v2902, %v2562
        %v2904 = vmax.f32 %v2903, %v2572
        %v2905 = vmax.f32 %v2904, %v2582
        %v2906 = vmax.f32 %v2905, %v2592
        %v2907 = vmax.f32 %v2906, %v2602
        %v2908 = vmax.f32 %v2907, %v2612
        %v2909 = vmax.f32 %v2908, %v2622
        %v2910 = vmax.f32 %v2909, %v2632
        %v2911 = vmax.f32 %v2910, %v2642
        %v2912 = vmax.f32 %v2911, %v2652
        %v2913 = vmax.f32 %v2912, %v2662
        %v2914 = vmax.f32 %v2913, %v2672
        %v2915 = vmax.f32 %v2914, %v2682
        %v2916 = vmax.f32 %v2915, %v2692
        %v2917 = vrot.slane %v2916, 4
        %v2918 = vmax.f32 %v2916, %v2917
        %v2919 = vrot.slane %v2918, 2
        %v2920 = vmax.f32 %v2918, %v2919
        %v2921 = vrot.slane %v2920, 1
        %v2922 = vmax.f32 %v2920, %v2921
        %v2923 = vmax.f32 %v2303, %v2313
        %v2924 = vmax.f32 %v2923, %v2323
        %v2925 = vmax.f32 %v2924, %v2333
        %v2926 = vmax.f32 %v2925, %v2343
        %v2927 = vmax.f32 %v2926, %v2353
        %v2928 = vmax.f32 %v2927, %v2363
        %v2929 = vmax.f32 %v2928, %v2373
        %v2930 = vmax.f32 %v2929, %v2383
        %v2931 = vmax.f32 %v2930, %v2393
        %v2932 = vmax.f32 %v2931, %v2403
        %v2933 = vmax.f32 %v2932, %v2413
        %v2934 = vmax.f32 %v2933, %v2423
        %v2935 = vmax.f32 %v2934, %v2433
        %v2936 = vmax.f32 %v2935, %v2443
        %v2937 = vmax.f32 %v2936, %v2453
        %v2938 = vmax.f32 %v2937, %v2463
        %v2939 = vmax.f32 %v2938, %v2473
        %v2940 = vmax.f32 %v2939, %v2483
        %v2941 = vmax.f32 %v2940, %v2493
        %v2942 = vmax.f32 %v2941, %v2503
        %v2943 = vmax.f32 %v2942, %v2513
        %v2944 = vmax.f32 %v2943, %v2523
        %v2945 = vmax.f32 %v2944, %v2533
        %v2946 = vmax.f32 %v2945, %v2543
        %v2947 = vmax.f32 %v2946, %v2553
        %v2948 = vmax.f32 %v2947, %v2563
        %v2949 = vmax.f32 %v2948, %v2573
        %v2950 = vmax.f32 %v2949, %v2583
        %v2951 = vmax.f32 %v2950, %v2593
        %v2952 = vmax.f32 %v2951, %v2603
        %v2953 = vmax.f32 %v2952, %v2613
        %v2954 = vmax.f32 %v2953, %v2623
        %v2955 = vmax.f32 %v2954, %v2633
        %v2956 = vmax.f32 %v2955, %v2643
        %v2957 = vmax.f32 %v2956, %v2653
        %v2958 = vmax.f32 %v2957, %v2663
        %v2959 = vmax.f32 %v2958, %v2673
        %v2960 = vmax.f32 %v2959, %v2683
        %v2961 = vmax.f32 %v2960, %v2693
        %v2962 = vrot.slane %v2961, 4
        %v2963 = vmax.f32 %v2961, %v2962
        %v2964 = vrot.slane %v2963, 2
        %v2965 = vmax.f32 %v2963, %v2964
        %v2966 = vrot.slane %v2965, 1
        %v2967 = vmax.f32 %v2965, %v2966
        %v2968 = vmax.f32 %v2304, %v2314
        %v2969 = vmax.f32 %v2968, %v2324
        %v2970 = vmax.f32 %v2969, %v2334
        %v2971 = vmax.f32 %v2970, %v2344
        %v2972 = vmax.f32 %v2971, %v2354
        %v2973 = vmax.f32 %v2972, %v2364
        %v2974 = vmax.f32 %v2973, %v2374
        %v2975 = vmax.f32 %v2974, %v2384
        %v2976 = vmax.f32 %v2975, %v2394
        %v2977 = vmax.f32 %v2976, %v2404
        %v2978 = vmax.f32 %v2977, %v2414
        %v2979 = vmax.f32 %v2978, %v2424
        %v2980 = vmax.f32 %v2979, %v2434
        %v2981 = vmax.f32 %v2980, %v2444
        %v2982 = vmax.f32 %v2981, %v2454
        %v2983 = vmax.f32 %v2982, %v2464
        %v2984 = vmax.f32 %v2983, %v2474
        %v2985 = vmax.f32 %v2984, %v2484
        %v2986 = vmax.f32 %v2985, %v2494
        %v2987 = vmax.f32 %v2986, %v2504
        %v2988 = vmax.f32 %v2987, %v2514
        %v2989 = vmax.f32 %v2988, %v2524
        %v2990 = vmax.f32 %v2989, %v2534
        %v2991 = vmax.f32 %v2990, %v2544
        %v2992 = vmax.f32 %v2991, %v2554
        %v2993 = vmax.f32 %v2992, %v2564
        %v2994 = vmax.f32 %v2993, %v2574
        %v2995 = vmax.f32 %v2994, %v2584
        %v2996 = vmax.f32 %v2995, %v2594
        %v2997 = vmax.f32 %v2996, %v2604
        %v2998 = vmax.f32 %v2997, %v2614
        %v2999 = vmax.f32 %v2998, %v2624
        %v3000 = vmax.f32 %v2999, %v2634
        %v3001 = vmax.f32 %v3000, %v2644
        %v3002 = vmax.f32 %v3001, %v2654
        %v3003 = vmax.f32 %v3002, %v2664
        %v3004 = vmax.f32 %v3003, %v2674
        %v3005 = vmax.f32 %v3004, %v2684
        %v3006 = vmax.f32 %v3005, %v2694
        %v3007 = vrot.slane %v3006, 4
        %v3008 = vmax.f32 %v3006, %v3007
        %v3009 = vrot.slane %v3008, 2
        %v3010 = vmax.f32 %v3008, %v3009
        %v3011 = vrot.slane %v3010, 1
        %v3012 = vmax.f32 %v3010, %v3011
        %v3013 = vmax.f32 %v2305, %v2315
        %v3014 = vmax.f32 %v3013, %v2325
        %v3015 = vmax.f32 %v3014, %v2335
        %v3016 = vmax.f32 %v3015, %v2345
        %v3017 = vmax.f32 %v3016, %v2355
        %v3018 = vmax.f32 %v3017, %v2365
        %v3019 = vmax.f32 %v3018, %v2375
        %v3020 = vmax.f32 %v3019, %v2385
        %v3021 = vmax.f32 %v3020, %v2395
        %v3022 = vmax.f32 %v3021, %v2405
        %v3023 = vmax.f32 %v3022, %v2415
        %v3024 = vmax.f32 %v3023, %v2425
        %v3025 = vmax.f32 %v3024, %v2435
        %v3026 = vmax.f32 %v3025, %v2445
        %v3027 = vmax.f32 %v3026, %v2455
        %v3028 = vmax.f32 %v3027, %v2465
        %v3029 = vmax.f32 %v3028, %v2475
        %v3030 = vmax.f32 %v3029, %v2485
        %v3031 = vmax.f32 %v3030, %v2495
        %v3032 = vmax.f32 %v3031, %v2505
        %v3033 = vmax.f32 %v3032, %v2515
        %v3034 = vmax.f32 %v3033, %v2525
        %v3035 = vmax.f32 %v3034, %v2535
        %v3036 = vmax.f32 %v3035, %v2545
        %v3037 = vmax.f32 %v3036, %v2555
        %v3038 = vmax.f32 %v3037, %v2565
        %v3039 = vmax.f32 %v3038, %v2575
        %v3040 = vmax.f32 %v3039, %v2585
        %v3041 = vmax.f32 %v3040, %v2595
        %v3042 = vmax.f32 %v3041, %v2605
        %v3043 = vmax.f32 %v3042, %v2615
        %v3044 = vmax.f32 %v3043, %v2625
        %v3045 = vmax.f32 %v3044, %v2635
        %v3046 = vmax.f32 %v3045, %v2645
        %v3047 = vmax.f32 %v3046, %v2655
        %v3048 = vmax.f32 %v3047, %v2665
        %v3049 = vmax.f32 %v3048, %v2675
        %v3050 = vmax.f32 %v3049, %v2685
        %v3051 = vmax.f32 %v3050, %v2695
        %v3052 = vrot.slane %v3051, 4
        %v3053 = vmax.f32 %v3051, %v3052
        %v3054 = vrot.slane %v3053, 2
        %v3055 = vmax.f32 %v3053, %v3054
        %v3056 = vrot.slane %v3055, 1
        %v3057 = vmax.f32 %v3055, %v3056
        %v3058 = vmax.f32 %v2306, %v2316
        %v3059 = vmax.f32 %v3058, %v2326
        %v3060 = vmax.f32 %v3059, %v2336
        %v3061 = vmax.f32 %v3060, %v2346
        %v3062 = vmax.f32 %v3061, %v2356
        %v3063 = vmax.f32 %v3062, %v2366
        %v3064 = vmax.f32 %v3063, %v2376
        %v3065 = vmax.f32 %v3064, %v2386
        %v3066 = vmax.f32 %v3065, %v2396
        %v3067 = vmax.f32 %v3066, %v2406
        %v3068 = vmax.f32 %v3067, %v2416
        %v3069 = vmax.f32 %v3068, %v2426
        %v3070 = vmax.f32 %v3069, %v2436
        %v3071 = vmax.f32 %v3070, %v2446
        %v3072 = vmax.f32 %v3071, %v2456
        %v3073 = vmax.f32 %v3072, %v2466
        %v3074 = vmax.f32 %v3073, %v2476
        %v3075 = vmax.f32 %v3074, %v2486
        %v3076 = vmax.f32 %v3075, %v2496
        %v3077 = vmax.f32 %v3076, %v2506
        %v3078 = vmax.f32 %v3077, %v2516
        %v3079 = vmax.f32 %v3078, %v2526
        %v3080 = vmax.f32 %v3079, %v2536
        %v3081 = vmax.f32 %v3080, %v2546
        %v3082 = vmax.f32 %v3081, %v2556
        %v3083 = vmax.f32 %v3082, %v2566
        %v3084 = vmax.f32 %v3083, %v2576
        %v3085 = vmax.f32 %v3084, %v2586
        %v3086 = vmax.f32 %v3085, %v2596
        %v3087 = vmax.f32 %v3086, %v2606
        %v3088 = vmax.f32 %v3087, %v2616
        %v3089 = vmax.f32 %v3088, %v2626
        %v3090 = vmax.f32 %v3089, %v2636
        %v3091 = vmax.f32 %v3090, %v2646
        %v3092 = vmax.f32 %v3091, %v2656
        %v3093 = vmax.f32 %v3092, %v2666
        %v3094 = vmax.f32 %v3093, %v2676
        %v3095 = vmax.f32 %v3094, %v2686
        %v3096 = vmax.f32 %v3095, %v2696
        %v3097 = vrot.slane %v3096, 4
        %v3098 = vmax.f32 %v3096, %v3097
        %v3099 = vrot.slane %v3098, 2
        %v3100 = vmax.f32 %v3098, %v3099
        %v3101 = vrot.slane %v3100, 1
        %v3102 = vmax.f32 %v3100, %v3101
        %v3103 = vmax.f32 %v2307, %v2317
        %v3104 = vmax.f32 %v3103, %v2327
        %v3105 = vmax.f32 %v3104, %v2337
        %v3106 = vmax.f32 %v3105, %v2347
        %v3107 = vmax.f32 %v3106, %v2357
        %v3108 = vmax.f32 %v3107, %v2367
        %v3109 = vmax.f32 %v3108, %v2377
        %v3110 = vmax.f32 %v3109, %v2387
        %v3111 = vmax.f32 %v3110, %v2397
        %v3112 = vmax.f32 %v3111, %v2407
        %v3113 = vmax.f32 %v3112, %v2417
        %v3114 = vmax.f32 %v3113, %v2427
        %v3115 = vmax.f32 %v3114, %v2437
        %v3116 = vmax.f32 %v3115, %v2447
        %v3117 = vmax.f32 %v3116, %v2457
        %v3118 = vmax.f32 %v3117, %v2467
        %v3119 = vmax.f32 %v3118, %v2477
        %v3120 = vmax.f32 %v3119, %v2487
        %v3121 = vmax.f32 %v3120, %v2497
        %v3122 = vmax.f32 %v3121, %v2507
        %v3123 = vmax.f32 %v3122, %v2517
        %v3124 = vmax.f32 %v3123, %v2527
        %v3125 = vmax.f32 %v3124, %v2537
        %v3126 = vmax.f32 %v3125, %v2547
        %v3127 = vmax.f32 %v3126, %v2557
        %v3128 = vmax.f32 %v3127, %v2567
        %v3129 = vmax.f32 %v3128, %v2577
        %v3130 = vmax.f32 %v3129, %v2587
        %v3131 = vmax.f32 %v3130, %v2597
        %v3132 = vmax.f32 %v3131, %v2607
        %v3133 = vmax.f32 %v3132, %v2617
        %v3134 = vmax.f32 %v3133, %v2627
        %v3135 = vmax.f32 %v3134, %v2637
        %v3136 = vmax.f32 %v3135, %v2647
        %v3137 = vmax.f32 %v3136, %v2657
        %v3138 = vmax.f32 %v3137, %v2667
        %v3139 = vmax.f32 %v3138, %v2677
        %v3140 = vmax.f32 %v3139, %v2687
        %v3141 = vmax.f32 %v3140, %v2697
        %v3142 = vrot.slane %v3141, 4
        %v3143 = vmax.f32 %v3141, %v3142
        %v3144 = vrot.slane %v3143, 2
        %v3145 = vmax.f32 %v3143, %v3144
        %v3146 = vrot.slane %v3145, 1
        %v3147 = vmax.f32 %v3145, %v3146
        %v3148 = vmax.f32 %v2742, 0.0
        %v3149 = vmax.f32 %v2787, 0.0
        %v3150 = vmax.f32 %v2832, 0.0
        %v3151 = vmax.f32 %v2877, 0.0
        %v3152 = vmax.f32 %v2922, 0.0
        %v3153 = vmax.f32 %v2967, 0.0
        %v3154 = vmax.f32 %v3012, 0.0
        %v3155 = vmax.f32 %v3057, 0.0
        %v3156 = vmax.f32 %v3102, 0.0
        %v3157 = vmax.f32 %v3147, 0.0
        %s3158 = sld [smem:[#allocation2]]
        %v3159 = vstv %s3158
        %v3160 = vmul.f32 %v3148, %v3159
        %v3161 = vmul.f32 %v3149, %v3159
        %v3162 = vmul.f32 %v3150, %v3159
        %v3163 = vmul.f32 %v3151, %v3159
        %v3164 = vmul.f32 %v3152, %v3159
        %v3165 = vmul.f32 %v3153, %v3159
        %v3166 = vmul.f32 %v3154, %v3159
        %v3167 = vmul.f32 %v3155, %v3159
        %v3168 = vmul.f32 %v3156, %v3159
        %v3169 = vmul.f32 %v3157, %v3159
        %s3170 = sld [smem:[#allocation2 + $0x1]]
        %v3171 = vstv %s3170
        %v3172 = vadd.f32 %v3160, %v3171
        %v3173 = vadd.f32 %v3161, %v3171
        %v3174 = vadd.f32 %v3162, %v3171
        %v3175 = vadd.f32 %v3163, %v3171
        %v3176 = vadd.f32 %v3164, %v3171
        %v3177 = vadd.f32 %v3165, %v3171
        %v3178 = vadd.f32 %v3166, %v3171
        %v3179 = vadd.f32 %v3167, %v3171
        %v3180 = vadd.f32 %v3168, %v3171
        %v3181 = vadd.f32 %v3169, %v3171
        %v3192 = vrot.slane %v3173, 7
        %v3193 = vrot.slane %v3174, 6
        %v3194 = vrot.slane %v3175, 5
        %v3195 = vrot.slane %v3176, 4
        %v3196 = vrot.slane %v3177, 3
        %v3197 = vrot.slane %v3178, 2
        %v3198 = vrot.slane %v3179, 1
        %v3199 = vrot.slane %v3181, 7
        %vm3200 = vcmask 1040384
        %v3201 = vsel %vm3200, %v3172, %v3192
        %vm3202 = vcmask 1042434
        %v3203 = vsel %vm3202, %v3193, %v3194
        %vm3204 = vcmask 1041408
        %v3205 = vsel %vm3204, %v3201, %v3203
        %vm3206 = vcmask 1044484
        %v3207 = vsel %vm3206, %v3195, %v3196
        %vm3208 = vcmask 1046534
        %v3209 = vsel %vm3208, %v3197, %v3198
        %vm3210 = vcmask 1045508
        %v3211 = vsel %vm3210, %v3207, %v3209
        %vm3212 = vcmask 1043456
        %v3213 = vsel %vm3212, %v3205, %v3211
        %v3214 = vsel %vm3200, %v3180, %v3199
        %3217 = vst [vmem:[%s232] sm:$0xff] %v3213
        %v3218 = vlaneseq
        %vm3219 = vcmp.ge.s32.totalorder %v3218, 0
        %vm3220 = vcmp.lt.s32.totalorder %v3218, 256
        %vm3221 = vmand %vm3219, %vm3220
        %3222 = vst.msk [vmem:[%s232 + $0x8] sm:$0x3] %vm3221, %v3214
        %s3223 = sand.u32 %s138, 1
        %s3224 = scalar_lea.sflag [#allocation3], %s3223
        %s3225 = sand.u32 %s138, 1
        %s3226 = smul.addr %s3225, 10
        %s3227 = scalar_lea.vmem [#allocation5], %s3226
        // Predicated region
        $region45: #{tpu_custom_call.1} parent=39 // pred_check
          %p3228 = pneg %p148
        $region46: #{tpu_custom_call.1} parent=39 // pred_check_branch
          %3230 = sbr.rel (%p3228) target = $region48
        $region47: #{tpu_custom_call.1} parent=39 // pred_region
          %3232 = vsyncadd %s3224, 0
          %s3233 = smul.addr %s20, 10
          %s3234 = scalar_lea.hbm %s5, %s3233
          %s3236 = sshll.u32 %s3227, 4
          %s3237 = int_to_ptr.vmem [resolvable:$true] %s3236
          %s3238 = sshll.u32 %s3234, 4
          %s3239 = int_to_ptr.hbm [resolvable:$true] %s3238
          %3241 = dma.vmem_to_hbm [thread:$0]  %s3237, 160, %s3239, %s3224
        $region48: #{tpu_custom_call.1} parent=39 // pred_fallthru
          _
      $region40: #{tpu_custom_call.1} parent=5 // pred_fallthru
        _
      %p3242 = scmp.le.s32.totalorder 2, %s15
      // Predicated region
      $region49: #{tpu_custom_call.1} parent=5 // pred_check
        %p3243 = pneg %p3242
      $region50: #{tpu_custom_call.1} parent=5 // pred_check_branch
        %3245 = sbr.rel (%p3243) target = $region52
      $region51: #{tpu_custom_call.1} parent=5 // pred_region
        %s3246 = ssub.s32 %s15, 2
        // Predicated region
        $region53: #{tpu_custom_call.1} parent=51 // pred_check
          %p3247 = pneg %p154
        $region54: #{tpu_custom_call.1} parent=51 // pred_check_branch
          %3249 = sbr.rel (%p3247) target = $region56
        $region55: #{tpu_custom_call.1} parent=51 // pred_region
          %s3250 = sand.u32 %s139, 1
          %s3251 = scalar_lea.sflag [#allocation3], %s3250
          %s3252 = sand.u32 %s139, 1
          %s3253 = smul.addr %s3252, 10
          %s3254 = scalar_lea.vmem [#allocation5], %s3253
          %3256 = dma.done %s3251, 160
        $region56: #{tpu_custom_call.1} parent=51 // pred_fallthru
          _
      $region52: #{tpu_custom_call.1} parent=5 // pred_fallthru
        _
    $region6: #{tpu_custom_call.1} parent=1 // loop_footer
      %s19 = sadd.s32 1, %s15
    $region7: #{tpu_custom_call.1} parent=1 // loop_footer_branch
      %14 = sbr.rel target = $region3
    $region8: #{tpu_custom_call.1} parent=1 // loop_exit
      _
    %3257 = vsyncpa [#allocation3], 1
    %s3258 = scalar_lea.sflag [#allocation3], 1
    %3259 = vsyncpa %s3258, 1
    %3260 = vsyncpa [#allocation4], 1
    %s3261 = scalar_lea.sflag [#allocation4], 1
    %3262 = vsyncpa %s3261, 1

</llo_original>
